<compile_context>
chip_gen: v6e
topology: v6e:2x2x1
jax: 0.10.0
libtpu: 0.0.40
codegen_flags: <defaults>
</compile_context>

<pallas_src>
import numpy as np
import jax
import jax.numpy as jnp
from jax import lax
from jax.experimental import pallas as pl
from jax.experimental.pallas import tpu as pltpu


# ----------------------------------------------------------------------------
# Parameter construction (deterministic, mirrors librosa.filters.mel + slaney
# normalization and torch.hann_window). Pure numpy glue, not part of the kernel.
# ----------------------------------------------------------------------------
def _hz_to_mel_slaney(freqs):
    freqs = np.asarray(freqs, dtype=np.float64)
    f_min, f_sp = 0.0, 200.0 / 3
    mels = (freqs - f_min) / f_sp
    min_log_hz = 1000.0
    min_log_mel = (min_log_hz - f_min) / f_sp
    logstep = np.log(6.4) / 27.0
    log_t = freqs >= min_log_hz
    mels = np.where(log_t, min_log_mel + np.log(np.maximum(freqs, 1e-10) / min_log_hz) / logstep, mels)
    return mels


def _mel_to_hz_slaney(mels):
    mels = np.asarray(mels, dtype=np.float64)
    f_min, f_sp = 0.0, 200.0 / 3
    freqs = f_min + f_sp * mels
    min_log_hz = 1000.0
    min_log_mel = (min_log_hz - f_min) / f_sp
    logstep = np.log(6.4) / 27.0
    log_t = mels >= min_log_mel
    freqs = np.where(log_t, min_log_hz * np.exp(logstep * (mels - min_log_mel)), freqs)
    return freqs


def make_mel_basis(sr, n_fft, n_mels, fmin, fmax):
    """librosa.filters.mel(htk=False, norm=None) followed by slaney area norm."""
    n_freq = n_fft // 2 + 1
    fftfreqs = np.linspace(0.0, sr / 2.0, n_freq)
    mel_min = _hz_to_mel_slaney(fmin)
    mel_max = _hz_to_mel_slaney(fmax)
    mel_pts = _mel_to_hz_slaney(np.linspace(mel_min, mel_max, n_mels + 2))  # (n_mels+2,)

    fdiff = np.diff(mel_pts)                                   # (n_mels+1,)
    ramps = mel_pts[:, None] - fftfreqs[None, :]               # (n_mels+2, n_freq)
    lower = -ramps[:-2] / fdiff[:-1, None]
    upper = ramps[2:] / fdiff[1:, None]
    weights = np.maximum(0.0, np.minimum(lower, upper))        # (n_mels, n_freq), norm=None

    # slaney normalization (the `slaney(...)` post-processing in the module)
    enorm = 2.0 / (mel_pts[2: n_mels + 2] - mel_pts[:n_mels])
    weights = weights * enorm[:, None]
    return weights.astype(np.float32)


def make_fused_windowed_dft(n_fft, win_length):
    """Windowed real-DFT matrices.

    Returns:
      fused: (n_fft, n_fft) = [ cos(k=0..n/2) | sin(k=1..n/2-1) ]  (sin cols 0, n/2 are zero)
      cos_mat, sin_mat: (n_fft, n_freq) unfused, for the pure-JAX reference.
    """
    assert n_fft % 2 == 0, "fused DFT packing requires even n_fft"
    n = np.arange(win_length, dtype=np.float64)
    win = 0.5 - 0.5 * np.cos(2.0 * np.pi * n / win_length)     # torch.hann_window (periodic)
    window = np.zeros(n_fft, dtype=np.float64)
    start = (n_fft - win_length) // 2                          # torch.stft centers short windows
    window[start:start + win_length] = win

    n_freq = n_fft // 2 + 1
    k = np.arange(n_freq, dtype=np.float64)
    ang = 2.0 * np.pi * np.outer(np.arange(n_fft, dtype=np.float64), k) / n_fft  # (n_fft, n_freq)
    cos_mat = window[:, None] * np.cos(ang)
    sin_mat = window[:, None] * np.sin(ang)                    # sign irrelevant for magnitude
    fused = np.concatenate([cos_mat, sin_mat[:, 1:n_freq - 1]], axis=1)          # (n_fft, n_fft)
    return fused.astype(np.float32), cos_mat.astype(np.float32), sin_mat.astype(np.float32)


def _round_up(x, m):
    return ((x + m - 1) // m) * m


def _frame_signal(x, n_fft, hop_length):
    """Frame a 1-D signal into (T, n_fft) rows with hop `hop_length` (gather-free when possible)."""
    L = x.shape[0]
    T = 1 + (L - n_fft) // hop_length
    if n_fft % hop_length == 0:
        # 75%-overlap framing expressed as n_fft//hop shifted strided slices + one concat
        # (avoids a general XLA gather that re-reads the audio n_fft/hop times through HBM).
        n_chunks = n_fft // hop_length
        n_rows = T + n_chunks - 1
        X = x[: n_rows * hop_length].reshape(n_rows, hop_length)
        frames = jnp.concatenate([X[c: c + T] for c in range(n_chunks)], axis=1)
    else:
        idx = jnp.arange(T)[:, None] * hop_length + jnp.arange(n_fft)[None, :]
        frames = x[idx]
    return frames.astype(jnp.float32), T


# ----------------------------------------------------------------------------
# Pallas kernel: fused windowed-DFT matmul + magnitude + mel matmul + clamp/log10.
# ----------------------------------------------------------------------------
def audio2mel_kernel(frames_ref, dft_ref, mel_lo_ref, nyq_row_ref, out_ref):
    half = dft_ref.shape[1] // 2

    # One fused windowed-DFT matmul (bf16 or f32 inputs, f32 MXU accumulate):
    # lanes [0..half-1] hold re(k) for k=0..half-1, lane `half` holds re(half)
    # (Nyquist), lanes [half+1 .. n_fft-1] hold im(k) for k=1..half-1.
    y = jnp.dot(frames_ref[...], dft_ref[...],
                preferred_element_type=jnp.float32)            # (tile, n_fft) f32

    # Slice first, then square each half (avoids a full-width squared temp).
    lo = y[:, :half]               # re(k),             k = 0..half-1
    hi = y[:, half:]               # [re(half), im(1), ..., im(half-1)]
    sq_lo = lo * lo
    sq_hi = hi * hi
    lane = lax.broadcasted_iota(jnp.int32, sq_lo.shape, 1)
    # |X(k)| for k = 0..half-1  (im(0) == 0, so lane 0 of sq_hi is excluded).
    mag_lo = jnp.sqrt(sq_lo + jnp.where(lane == 0, 0.0, sq_hi))

    # Mel projection over bins 0..half-1 (kept in f32; tiny next to the DFT matmul).
    mel = jnp.dot(mag_lo, mel_lo_ref[...], preferred_element_type=jnp.float32)
    # Nyquist bin (k = half): exact rank-1 VPU update |re(half)| * mel_row instead
    # of a second MXU matmul against an (almost-certainly) all-zero matrix.
    mel = mel + jnp.abs(hi[:, 0:1]) * nyq_row_ref[...]

    out_ref[...] = jnp.log10(jnp.maximum(mel, 1e-5))


def audio2mel(audio, *, n_fft=1024, hop_length=256, win_length=1024,
              sampling_rate=22050, n_mel_channels=80, mel_fmin=0.0,
              mel_fmax=None, tile_t=512, dft_dtype=jnp.bfloat16):
    """audio: (1, 1, num_samples) or (1, num_samples) float32 -> (1, n_mel_channels, T) float32.

    dft_dtype: input dtype of the windowed-DFT matmul.  bfloat16 (default) is the
    MXU fast path (~1e-3 accuracy in log-mel space); jnp.float32 matches the
    reference to ~1e-4.
    """
    mel_fmax = float(sampling_rate // 2) if mel_fmax is None else mel_fmax
    assert n_fft % 2 == 0
    half = n_fft // 2
    assert half % 128 == 0, "fused half-split needs lane-aligned half (n_fft % 256 == 0)"
    n_mel = n_mel_channels
    n_mel_pad = _round_up(n_mel, 128)        # lane-dense output (80 -> 128), sliced back below

    # --- constant matrices (host-side numpy, deterministic) -------------------
    fused_dft_np, _, _ = make_fused_windowed_dft(n_fft, win_length)             # (n_fft, n_fft)
    mel_basis = make_mel_basis(sampling_rate, n_fft, n_mel, mel_fmin, mel_fmax)  # (n_mel, n_freq)
    mel_t = mel_basis.T                                                          # (n_freq, n_mel)
    mel_lo_np = np.zeros((half, n_mel_pad), np.float32)
    mel_lo_np[:, :n_mel] = mel_t[:half]            # freq bins 0 .. half-1
    nyq_row_np = np.zeros((1, n_mel_pad), np.float32)
    nyq_row_np[0, :n_mel] = mel_t[half]            # Nyquist-bin mel weights (all ~0 for fmax <= sr/2)

    fused_dft = jnp.asarray(fused_dft_np, dtype=dft_dtype)
    mel_lo = jnp.asarray(mel_lo_np)
    nyq_row = jnp.asarray(nyq_row_np)

    # --- glue: reflect pad + framing (matches F.pad + torch.stft(center=False)) ---
    # NOTE: framing stays wrapper-side (gather-free strided slices).  Moving it
    # in-kernel (pl.ANY + manual DMA double-buffer) would save the ~4x frames HBM
    # round trip, but the kernel is MXU-bound so the end-to-end win is a few %.
    p = (n_fft - hop_length) // 2
    x = jnp.reshape(audio, (-1,))                  # module assumes batch 1
    x = jnp.pad(x, (p, p), mode="reflect")
    frames, T = _frame_signal(x, n_fft, hop_length)
    frames = frames.astype(dft_dtype)              # halve HBM traffic in bf16 mode

    # --- frame-axis tiling ------------------------------------------------------
    # Round to the sublane granule (8 f32 / 16 bf16) and force >=2 grid steps
    # whenever possible so dimension_semantics=("parallel",) can shard the frame
    # tiles across both v7x TensorCores (one tiny extra step on single-TC chips).
    granule = 8 if np.dtype(dft_dtype).itemsize == 4 else 16
    tile = max(granule, min(_round_up(tile_t, granule), _round_up(T, granule)))
    if pl.cdiv(T, tile) < 2:
        tile = max(granule, _round_up(pl.cdiv(T, 2), granule))
    T_pad = _round_up(T, tile)
    if T_pad != T:
        # Padded rows produce log10(1e-5) = -5 and are sliced off below.
        frames = jnp.pad(frames, ((0, T_pad - T), (0, 0)))

    # --- right-sized scoped VMEM request (instead of a flat 48 MiB) -------------
    isz = np.dtype(dft_dtype).itemsize
    buf_bytes = (2 * tile * n_fft * isz            # frame tiles (double-buffered)
                 + 2 * n_fft * n_fft * isz         # fused DFT (worst case: double-buffered)
                 + 2 * half * n_mel_pad * 4        # mel matrix
                 + 2 * 8 * n_mel_pad * 4           # Nyquist row (sublane-padded)
                 + 2 * tile * n_mel_pad * 4)       # output tiles
    temp_bytes = 6 * tile * n_fft * 4              # y / squared halves / magnitudes (f32)
    vmem_limit = int(1.25 * (buf_bytes + temp_bytes)) + (4 << 20)
    vmem_limit = min(max(vmem_limit, 32 << 20), 64 << 20)

    grid = (T_pad // tile,)
    out_shape = jax.ShapeDtypeStruct((T_pad, n_mel_pad), jnp.float32)

    def _call(single_buffer_consts):
        def const_spec(shape):
            if single_buffer_consts:
                # Constant index_map -> single-buffer: no point double-buffering
                # data that never changes across grid steps (halves constant VMEM).
                return pl.BlockSpec(shape, lambda i: (0, 0),
                                    pipeline_mode=pl.Buffered(1))
            return pl.BlockSpec(shape, lambda i: (0, 0))

        return pl.pallas_call(
            audio2mel_kernel,
            out_shape=out_shape,
            grid=grid,
            in_specs=[
                pl.BlockSpec((tile, n_fft), lambda i: (i, 0)),   # frame tiles (pipelined)
                const_spec((n_fft, n_fft)),                      # fused windowed DFT (VMEM-resident)
                const_spec((half, n_mel_pad)),                   # mel rows for bins 0..half-1
                const_spec((1, n_mel_pad)),                      # Nyquist mel row (rank-1 update)
            ],
            out_specs=pl.BlockSpec((tile, n_mel_pad), lambda i: (i, 0)),
            compiler_params=pltpu.CompilerParams(
                dimension_semantics=("parallel",),               # shard frame tiles on v7x dual TC
                vmem_limit_bytes=vmem_limit,
            ),
        )(frames, fused_dft, mel_lo, nyq_row)

    try:
        out = _call(True)
    except Exception:
        # pipeline_mode=pl.Buffered(1) is a pure VMEM-footprint optimization; fall
        # back to default (double-buffered) constants if this build rejects it.
        out = _call(False)

    # Slice off T / mel-channel padding, back to PyTorch convention (B, n_mel, T).
    return out[:T, :n_mel].T[None, :, :]


# ----------------------------------------------------------------------------
# Pure-JAX reference (unfused cos/sin matmuls, gather framing) for sanity checks.
# ----------------------------------------------------------------------------
def audio2mel_ref(audio, *, n_fft=1024, hop_length=256, win_length=1024,
                  sampling_rate=22050, n_mel_channels=80, mel_fmin=0.0,
                  mel_fmax=None, dft_dtype=jnp.float32):
    mel_fmax = float(sampling_rate // 2) if mel_fmax is None else mel_fmax
    mel_basis = jnp.asarray(make_mel_basis(sampling_rate, n_fft, n_mel_channels, mel_fmin, mel_fmax))
    _, cos_mat, sin_mat = make_fused_windowed_dft(n_fft, win_length)
    p = (n_fft - hop_length) // 2
    x = jnp.pad(jnp.reshape(audio, (-1,)), (p, p), mode="reflect")
    T = 1 + (x.shape[0] - n_fft) // hop_length
    idx = jnp.arange(T)[:, None] * hop_length + jnp.arange(n_fft)[None, :]
    frames = x[idx].astype(dft_dtype)
    re = jnp.dot(frames, jnp.asarray(cos_mat, dtype=dft_dtype), preferred_element_type=jnp.float32)
    im = jnp.dot(frames, jnp.asarray(sin_mat, dtype=dft_dtype), preferred_element_type=jnp.float32)
    mag = jnp.sqrt(re * re + im * im)
    mel = jnp.dot(mag, mel_basis.T, preferred_element_type=jnp.float32)
    return jnp.log10(jnp.maximum(mel, 1e-5)).T[None]


if __name__ == "__main__":
    key = jax.random.PRNGKey(0)
    k1, k2 = jax.random.split(key)

    # --- Test 1: small config (n_fft=256, hop=64), f32 path, strict tolerance ----
    num_samples = 1024
    kw = dict(n_fft=256, hop_length=64, win_length=256,
              sampling_rate=22050, n_mel_channels=80)
    audio = jax.random.normal(k1, (1, 1, num_samples), dtype=jnp.float32)
    out = jax.block_until_ready(audio2mel(audio, dft_dtype=jnp.float32, **kw))
    ref = jax.block_until_ready(audio2mel_ref(audio, **kw))
    p = (kw["n_fft"] - kw["hop_length"]) // 2
    expected_T = 1 + (num_samples + 2 * p - kw["n_fft"]) // kw["hop_length"]   # = 16
    assert out.shape == (1, kw["n_mel_channels"], expected_T), out.shape
    assert ref.shape == out.shape, (ref.shape, out.shape)
    np.testing.assert_allclose(np.asarray(out), np.asarray(ref), rtol=1e-4, atol=1e-4)

    # --- Test 2: module-default FFT config, f32 path, multi-tile grid + padding --
    num_samples2 = 20480
    kw2 = dict(n_fft=1024, hop_length=256, win_length=1024,
               sampling_rate=22050, n_mel_channels=80)
    audio2 = jax.random.normal(k2, (1, 1, num_samples2), dtype=jnp.float32)
    out2 = jax.block_until_ready(audio2mel(audio2, dft_dtype=jnp.float32, tile_t=32, **kw2))
    ref2 = jax.block_until_ready(audio2mel_ref(audio2, **kw2))
    assert out2.shape == ref2.shape, (out2.shape, ref2.shape)
    np.testing.assert_allclose(np.asarray(out2), np.asarray(ref2), rtol=1e-4, atol=1e-4)

    # --- Test 3: default (bf16 DFT matmul) fast path ------------------------------
    out3 = jax.block_until_ready(audio2mel(audio2, **kw2))       # default tile_t / bf16
    ref3_bf16 = jax.block_until_ready(audio2mel_ref(audio2, dft_dtype=jnp.bfloat16, **kw2))
    assert out3.shape == ref2.shape, (out3.shape, ref2.shape)
    # Structural check against a bf16-matched reference (tight) ...
    np.testing.assert_allclose(np.asarray(out3), np.asarray(ref3_bf16), rtol=0.0, atol=5e-3)
    # ... plus accuracy sanity vs the f32 reference in log-mel space (loose).
    diff = np.abs(np.asarray(out3) - np.asarray(ref2))
    assert diff.max() < 6e-2 and diff.mean() < 1e-2, (diff.max(), diff.mean())

    print("KERNEL_OK")
</pallas_src>

<mosaic_0001>
module attributes {stable_mosaic.version = 11 : i64} {
  func.func @audio2mel_kernel(%arg0: i32, %arg1: memref<8x256xf32, #tpu.memory_space<vmem>>, %arg2: memref<256x256xf32, #tpu.memory_space<vmem>>, %arg3: memref<128x128xf32, #tpu.memory_space<vmem>>, %arg4: memref<1x128xf32, #tpu.memory_space<vmem>>, %arg5: memref<8x128xf32, #tpu.memory_space<vmem>>) attributes {dimension_semantics = [#tpu.dimension_semantics<parallel>], iteration_bounds = array<i64: 2>, scalar_prefetch = 0 : i64, scratch_operands = 0 : i64, tpu.core_type = #tpu.core_type<tc>, window_params = [{transform_indices = @transform_0, window_bounds = array<i64: 8, 256>}, {pipeline_mode = #tpu.pipeline_mode<synchronous>, transform_indices = @transform_1, window_bounds = array<i64: 256, 256>}, {pipeline_mode = #tpu.pipeline_mode<synchronous>, transform_indices = @transform_2, window_bounds = array<i64: 128, 128>}, {pipeline_mode = #tpu.pipeline_mode<synchronous>, transform_indices = @transform_3, window_bounds = array<i64: 1, 128>}, {transform_indices = @transform_4, window_bounds = array<i64: 8, 128>}]} {
    %c0 = arith.constant 0 : index
    %c0_0 = arith.constant 0 : index
    %0 = vector.load %arg1[%c0, %c0_0] : memref<8x256xf32, #tpu.memory_space<vmem>>, vector<8x256xf32>
    %c0_1 = arith.constant 0 : index
    %c0_2 = arith.constant 0 : index
    %1 = vector.load %arg2[%c0_1, %c0_2] : memref<256x256xf32, #tpu.memory_space<vmem>>, vector<256x256xf32>
    %cst = arith.constant dense<0.000000e+00> : vector<8x256xf32>
    %2 = tpu.matmul %0, %1, %cst {dimension_numbers = #tpu.dot_dimension_numbers<[1], [0], [0], [1], [0, 0, 1, 1], [], []>} : vector<8x256xf32>, vector<256x256xf32>, vector<8x256xf32> -> vector<8x256xf32>
    %3 = vector.extract_strided_slice %2 {offsets = [0, 0], sizes = [8, 128], strides = [1, 1]} : vector<8x256xf32> to vector<8x128xf32>
    %4 = vector.extract_strided_slice %2 {offsets = [0, 128], sizes = [8, 128], strides = [1, 1]} : vector<8x256xf32> to vector<8x128xf32>
    %5 = arith.mulf %3, %3 : vector<8x128xf32>
    %6 = arith.mulf %4, %4 : vector<8x128xf32>
    %7 = tpu.iota {dimensions = array<i32: 1>} : vector<8x128xi32>
    %c0_i32 = arith.constant 0 : i32
    %8 = vector.broadcast %c0_i32 : i32 to vector<8x128xi32>
    %9 = arith.cmpi eq, %7, %8 : vector<8x128xi32>
    %cst_3 = arith.constant 0.000000e+00 : f32
    %10 = vector.broadcast %cst_3 : f32 to vector<8x128xf32>
    %11 = arith.select %9, %10, %6 : vector<8x128xi1>, vector<8x128xf32>
    %12 = arith.addf %5, %11 : vector<8x128xf32>
    %13 = math.sqrt %12 : vector<8x128xf32>
    %c0_4 = arith.constant 0 : index
    %c0_5 = arith.constant 0 : index
    %14 = vector.load %arg3[%c0_4, %c0_5] : memref<128x128xf32, #tpu.memory_space<vmem>>, vector<128x128xf32>
    %cst_6 = arith.constant dense<0.000000e+00> : vector<8x128xf32>
    %15 = tpu.matmul %13, %14, %cst_6 {dimension_numbers = #tpu.dot_dimension_numbers<[1], [0], [0], [1], [0, 0, 1, 1], [], []>} : vector<8x128xf32>, vector<128x128xf32>, vector<8x128xf32> -> vector<8x128xf32>
    %16 = vector.extract_strided_slice %4 {offsets = [0, 0], sizes = [8, 1], strides = [1, 1]} : vector<8x128xf32> to vector<8x1xf32>
    %17 = math.absf %16 : vector<8x1xf32>
    %c0_7 = arith.constant 0 : index
    %c0_8 = arith.constant 0 : index
    %18 = vector.load %arg4[%c0_7, %c0_8] : memref<1x128xf32, #tpu.memory_space<vmem>>, vector<1x128xf32>
    %19 = vector.broadcast %17 : vector<8x1xf32> to vector<8x128xf32>
    %20 = vector.broadcast %18 : vector<1x128xf32> to vector<8x128xf32>
    %21 = arith.mulf %19, %20 : vector<8x128xf32>
    %22 = arith.addf %15, %21 : vector<8x128xf32>
    %cst_9 = arith.constant 9.99999974E-6 : f32
    %23 = vector.broadcast %cst_9 : f32 to vector<8x128xf32>
    %24 = arith.maximumf %22, %23 : vector<8x128xf32>
    %25 = math.log %24 : vector<8x128xf32>
    %cst_10 = arith.constant 0.434294492 : f32
    %26 = vector.broadcast %cst_10 : f32 to vector<8x128xf32>
    %27 = arith.mulf %25, %26 : vector<8x128xf32>
    %c0_11 = arith.constant 0 : index
    %c0_12 = arith.constant 0 : index
    %28 = vector.load %arg5[%c0_11, %c0_12] : memref<8x128xf32, #tpu.memory_space<vmem>>, vector<8x128xf32>
    tpu.vector_store %arg5[%c0_11, %c0_12], %27 {strides = array<i32>} : memref<8x128xf32, #tpu.memory_space<vmem>>, vector<8x128xf32>,
    return
  }
  func.func @transform_0(%arg0: i32) -> (i32, i32) {
    %c0_i32 = arith.constant 0 : i32
    %c0_i32_0 = arith.constant 0 : i32
    return %arg0, %c0_i32 : i32, i32
  }
  func.func @transform_1(%arg0: i32) -> (i32, i32) {
    %c0_i32 = arith.constant 0 : i32
    %c0_i32_0 = arith.constant 0 : i32
    %c0_i32_1 = arith.constant 0 : i32
    return %c0_i32, %c0_i32_0 : i32, i32
  }
  func.func @transform_2(%arg0: i32) -> (i32, i32) {
    %c0_i32 = arith.constant 0 : i32
    %c0_i32_0 = arith.constant 0 : i32
    %c0_i32_1 = arith.constant 0 : i32
    return %c0_i32, %c0_i32_0 : i32, i32
  }
  func.func @transform_3(%arg0: i32) -> (i32, i32) {
    %c0_i32 = arith.constant 0 : i32
    %c0_i32_0 = arith.constant 0 : i32
    %c0_i32_1 = arith.constant 0 : i32
    return %c0_i32, %c0_i32_0 : i32, i32
  }
  func.func @transform_4(%arg0: i32) -> (i32, i32) {
    %c0_i32 = arith.constant 0 : i32
    %c0_i32_0 = arith.constant 0 : i32
    return %arg0, %c0_i32 : i32, i32
  }
}

module attributes {stable_mosaic.version = 11 : i64} {
  func.func @audio2mel_kernel(%arg0: i32, %arg1: memref<8x256xf32, #tpu.memory_space<vmem>>, %arg2: memref<256x256xf32, #tpu.memory_space<vmem>>, %arg3: memref<128x128xf32, #tpu.memory_space<vmem>>, %arg4: memref<1x128xf32, #tpu.memory_space<vmem>>, %arg5: memref<8x128xf32, #tpu.memory_space<vmem>>) attributes {dimension_semantics = [#tpu.dimension_semantics<parallel>], iteration_bounds = array<i64: 2>, scalar_prefetch = 0 : i64, scratch_operands = 0 : i64, tpu.core_type = #tpu.core_type<tc>, window_params = [{transform_indices = @transform_0, window_bounds = array<i64: 8, 256>}, {pipeline_mode = #tpu.pipeline_mode<synchronous>, transform_indices = @transform_1, window_bounds = array<i64: 256, 256>}, {pipeline_mode = #tpu.pipeline_mode<synchronous>, transform_indices = @transform_2, window_bounds = array<i64: 128, 128>}, {pipeline_mode = #tpu.pipeline_mode<synchronous>, transform_indices = @transform_3, window_bounds = array<i64: 1, 128>}, {transform_indices = @transform_4, window_bounds = array<i64: 8, 128>}]} {
    %c0 = arith.constant 0 : index
    %c0_0 = arith.constant 0 : index
    %0 = vector.load %arg1[%c0, %c0_0] : memref<8x256xf32, #tpu.memory_space<vmem>>, vector<8x256xf32>
    %c0_1 = arith.constant 0 : index
    %c0_2 = arith.constant 0 : index
    %1 = vector.load %arg2[%c0_1, %c0_2] : memref<256x256xf32, #tpu.memory_space<vmem>>, vector<256x256xf32>
    %cst = arith.constant dense<0.000000e+00> : vector<8x256xf32>
    %2 = tpu.matmul %0, %1, %cst {dimension_numbers = #tpu.dot_dimension_numbers<[1], [0], [0], [1], [0, 0, 1, 1], [], []>} : vector<8x256xf32>, vector<256x256xf32>, vector<8x256xf32> -> vector<8x256xf32>
    %3 = vector.extract_strided_slice %2 {offsets = [0, 0], sizes = [8, 128], strides = [1, 1]} : vector<8x256xf32> to vector<8x128xf32>
    %4 = vector.extract_strided_slice %2 {offsets = [0, 128], sizes = [8, 128], strides = [1, 1]} : vector<8x256xf32> to vector<8x128xf32>
    %5 = arith.mulf %3, %3 : vector<8x128xf32>
    %6 = arith.mulf %4, %4 : vector<8x128xf32>
    %7 = tpu.iota {dimensions = array<i32: 1>} : vector<8x128xi32>
    %c0_i32 = arith.constant 0 : i32
    %8 = vector.broadcast %c0_i32 : i32 to vector<8x128xi32>
    %9 = arith.cmpi eq, %7, %8 : vector<8x128xi32>
    %cst_3 = arith.constant 0.000000e+00 : f32
    %10 = vector.broadcast %cst_3 : f32 to vector<8x128xf32>
    %11 = arith.select %9, %10, %6 : vector<8x128xi1>, vector<8x128xf32>
    %12 = arith.addf %5, %11 : vector<8x128xf32>
    %13 = math.sqrt %12 : vector<8x128xf32>
    %c0_4 = arith.constant 0 : index
    %c0_5 = arith.constant 0 : index
    %14 = vector.load %arg3[%c0_4, %c0_5] : memref<128x128xf32, #tpu.memory_space<vmem>>, vector<128x128xf32>
    %cst_6 = arith.constant dense<0.000000e+00> : vector<8x128xf32>
    %15 = tpu.matmul %13, %14, %cst_6 {dimension_numbers = #tpu.dot_dimension_numbers<[1], [0], [0], [1], [0, 0, 1, 1], [], []>} : vector<8x128xf32>, vector<128x128xf32>, vector<8x128xf32> -> vector<8x128xf32>
    %16 = vector.extract_strided_slice %4 {offsets = [0, 0], sizes = [8, 1], strides = [1, 1]} : vector<8x128xf32> to vector<8x1xf32>
    %17 = math.absf %16 : vector<8x1xf32>
    %c0_7 = arith.constant 0 : index
    %c0_8 = arith.constant 0 : index
    %18 = vector.load %arg4[%c0_7, %c0_8] : memref<1x128xf32, #tpu.memory_space<vmem>>, vector<1x128xf32>
    %19 = vector.broadcast %17 : vector<8x1xf32> to vector<8x128xf32>
    %20 = vector.broadcast %18 : vector<1x128xf32> to vector<8x128xf32>
    %21 = arith.mulf %19, %20 : vector<8x128xf32>
    %22 = arith.addf %15, %21 : vector<8x128xf32>
    %cst_9 = arith.constant 9.99999974E-6 : f32
    %23 = vector.broadcast %cst_9 : f32 to vector<8x128xf32>
    %24 = arith.maximumf %22, %23 : vector<8x128xf32>
    %25 = math.log %24 : vector<8x128xf32>
    %cst_10 = arith.constant 0.434294492 : f32
    %26 = vector.broadcast %cst_10 : f32 to vector<8x128xf32>
    %27 = arith.mulf %25, %26 : vector<8x128xf32>
    %c0_11 = arith.constant 0 : index
    %c0_12 = arith.constant 0 : index
    %28 = vector.load %arg5[%c0_11, %c0_12] : memref<8x128xf32, #tpu.memory_space<vmem>>, vector<8x128xf32>
    tpu.vector_store %arg5[%c0_11, %c0_12], %27 {strides = array<i32>} : memref<8x128xf32, #tpu.memory_space<vmem>>, vector<8x128xf32>,
    return
  }
  func.func @transform_0(%arg0: i32) -> (i32, i32) {
    %c0_i32 = arith.constant 0 : i32
    %c0_i32_0 = arith.constant 0 : i32
    return %arg0, %c0_i32 : i32, i32
  }
  func.func @transform_1(%arg0: i32) -> (i32, i32) {
    %c0_i32 = arith.constant 0 : i32
    %c0_i32_0 = arith.constant 0 : i32
    %c0_i32_1 = arith.constant 0 : i32
    return %c0_i32, %c0_i32_0 : i32, i32
  }
  func.func @transform_2(%arg0: i32) -> (i32, i32) {
    %c0_i32 = arith.constant 0 : i32
    %c0_i32_0 = arith.constant 0 : i32
    %c0_i32_1 = arith.constant 0 : i32
    return %c0_i32, %c0_i32_0 : i32, i32
  }
  func.func @transform_3(%arg0: i32) -> (i32, i32) {
    %c0_i32 = arith.constant 0 : i32
    %c0_i32_0 = arith.constant 0 : i32
    %c0_i32_1 = arith.constant 0 : i32
    return %c0_i32, %c0_i32_0 : i32, i32
  }
  func.func @transform_4(%arg0: i32) -> (i32, i32) {
    %c0_i32 = arith.constant 0 : i32
    %c0_i32_0 = arith.constant 0 : i32
    return %arg0, %c0_i32 : i32, i32
  }
}

</mosaic_0001>

<llo_original>
// kernel: tpu_custom_call.1
$region0: #{tpu_custom_call.1}
  #allocation0 [shape = 'u32[]', space=smem, size = 0x4, offset = 0x4, fixed_abs, tag = 'smem constant byte address 0x4 - core index']
  #allocation1 [shape = 'u32[144,128]{1,0:T(1,128)}', space=vmem, size = 0x12000, scoped, tag = 'internal scratch']
  %s0 = inlined_call_operand.hbm [shape: f32[16,256], index: 0, kind: input, shape index: {}]
  %s1 = inlined_call_operand.hbm [shape: f32[256,256], index: 1, kind: input, shape index: {}]
  %s2 = inlined_call_operand.hbm [shape: f32[128,128], index: 2, kind: input, shape index: {}]
  %s3 = inlined_call_operand.vmem [shape: f32[1,128], index: 3, kind: input, shape index: {}]
  %s4 = inlined_call_operand.hbm [shape: f32[16,128], index: 4, kind: output, shape index: {}]
  %s5 = sld [smem:[#allocation0]]
  $region61: #{tpu_custom_call.1} parent=0
    _
  %s7 = ssub.s32 1, %s5
  %s8 = scalar_select 0, %s7, %s5
  $region1: #{tpu_custom_call.1} parent=0
    #allocation2 [shape = 'u8[16384]{0}', space=vmem, size = 0x4000, scoped, tag = 'input window, operand 0']
    #allocation3 [shape = 's32[2]{0}', space=sflag, size = 0x8, scoped, tag = 'scoped memory for tpu_custom_call.1']
    #allocation4 [shape = 's32[2]{0}', space=sflag, size = 0x8, scoped, tag = 'scoped memory for tpu_custom_call.1']
    #allocation5 [shape = 'u8[262144]{0}', space=vmem, size = 0x40000, scoped, tag = 'input window, operand 1, single buffered']
    #allocation6 [shape = 's32[1]{0}', space=sflag, size = 0x4, scoped, tag = 'scoped memory for tpu_custom_call.1']
    #allocation7 [shape = 'u8[65536]{0}', space=vmem, size = 0x10000, scoped, tag = 'input window, operand 2, single buffered']
    #allocation8 [shape = 'u8[8192]{0}', space=vmem, size = 0x2000, scoped, tag = 'output window, operand 0']
    %9 = vsyncpa [#allocation3], 0
    %s10 = scalar_lea.sflag [#allocation3], 1
    %11 = vsyncpa %s10, 0
    %12 = vsyncpa [#allocation6], 0
    %13 = vsyncpa [#allocation4], 0
    %s14 = scalar_lea.sflag [#allocation4], 1
    %15 = vsyncpa %s14, 0
    loop: start=0, step=1, limit=4
    $region2: #{tpu_custom_call.1} parent=1 // loop_pre_header
      _
    $region3: #{tpu_custom_call.1} parent=1 // loop_header
      %s17 = sphi 0, %s21
      %p18 = scmp.ge.s32.totalorder %s17, 4
      %s27 = sphi 0, %s29
      %s30 = sphi 0, %s27
      %s31 = sphi 0, %s30
      %s47 = sphi 0, %s31
      %s51 = sphi 0, %s51
      %s53 = sphi 0, %s51
      %s54 = sphi 0, %s53
      %s68 = sphi 0, %s54
      %s72 = sphi 0, %s72
      %s74 = sphi 0, %s72
      %s75 = sphi 0, %s74
      %s89 = sphi 0, %s75
      %s93 = sphi 0, %s93
      %s95 = sphi 0, %s93
      %s96 = sphi 0, %s95
      %s110 = sphi 0, %s96
      %s116 = sphi 0, %s118
      %s119 = sphi 0, %s116
      %s120 = sphi 0, %s119
      %s136 = sphi 0, %s120
    $region4: #{tpu_custom_call.1} parent=1 // loop_header_branch
      %20 = sbr.rel (%p18) target = $region8
    $region5: #{tpu_custom_call.1} parent=1 // loop_body
      %s22 = ssub.s32 %s17, 1
      %s23 = ssub.s32 %s17, 2
      %s24 = sadd.s32 %s17, 1
      %s25 = ssub.s32 %s17, %s24
      %p26 = scmp.eq.s32.totalorder %s25, 0
      %s28 = sadd.s32 %s27, 1
      %s29 = scalar_select %p26, %s27, %s28
      %p32 = pneg %p26
      %p33 = scmp.eq.s32.totalorder %s17, 1
      %p34 = por %p32, %p33
      %p35 = scmp.ne.s32.totalorder %s27, %s30
      %p36 = scmp.eq.s32.totalorder %s17, 0
      %p37 = por %p35, %p36
      %p38 = scmp.ne.s32.totalorder %s27, %s30
      %p39 = scmp.eq.s32.totalorder %s22, 1
      %p40 = por %p38, %p39
      %p41 = scmp.ne.s32.totalorder %s30, %s31
      %p42 = scmp.eq.s32.totalorder %s22, 0
      %p43 = por %p41, %p42
      %p44 = scmp.ne.s32.totalorder %s30, %s31
      %p45 = scmp.eq.s32.totalorder %s23, 1
      %p46 = por %p44, %p45
      %p48 = scmp.ne.s32.totalorder %s31, %s47
      %p49 = scmp.eq.s32.totalorder %s23, 0
      %p50 = por %p48, %p49
      %s52 = sadd.s32 %s51, 1
      %p55 = scmp.eq.s32.totalorder %s17, 1
      %p56 = scmp.ne.s32.totalorder %s51, %s53
      %p57 = scmp.eq.s32.totalorder %s17, 0
      %p58 = por %p56, %p57
      %p59 = scmp.ne.s32.totalorder %s51, %s53
      %p60 = scmp.eq.s32.totalorder %s22, 1
      %p61 = por %p59, %p60
      %p62 = scmp.ne.s32.totalorder %s53, %s54
      %p63 = scmp.eq.s32.totalorder %s22, 0
      %p64 = por %p62, %p63
      %p65 = scmp.ne.s32.totalorder %s53, %s54
      %p66 = scmp.eq.s32.totalorder %s23, 1
      %p67 = por %p65, %p66
      %p69 = scmp.ne.s32.totalorder %s54, %s68
      %p70 = scmp.eq.s32.totalorder %s23, 0
      %p71 = por %p69, %p70
      %s73 = sadd.s32 %s72, 1
      %p76 = scmp.eq.s32.totalorder %s17, 1
      %p77 = scmp.ne.s32.totalorder %s72, %s74
      %p78 = scmp.eq.s32.totalorder %s17, 0
      %p79 = por %p77, %p78
      %p80 = scmp.ne.s32.totalorder %s72, %s74
      %p81 = scmp.eq.s32.totalorder %s22, 1
      %p82 = por %p80, %p81
      %p83 = scmp.ne.s32.totalorder %s74, %s75
      %p84 = scmp.eq.s32.totalorder %s22, 0
      %p85 = por %p83, %p84
      %p86 = scmp.ne.s32.totalorder %s74, %s75
      %p87 = scmp.eq.s32.totalorder %s23, 1
      %p88 = por %p86, %p87
      %p90 = scmp.ne.s32.totalorder %s75, %s89
      %p91 = scmp.eq.s32.totalorder %s23, 0
      %p92 = por %p90, %p91
      %s94 = sadd.s32 %s93, 1
      %p97 = scmp.eq.s32.totalorder %s17, 1
      %p98 = scmp.ne.s32.totalorder %s93, %s95
      %p99 = scmp.eq.s32.totalorder %s17, 0
      %p100 = por %p98, %p99
      %p101 = scmp.ne.s32.totalorder %s93, %s95
      %p102 = scmp.eq.s32.totalorder %s22, 1
      %p103 = por %p101, %p102
      %p104 = scmp.ne.s32.totalorder %s95, %s96
      %p105 = scmp.eq.s32.totalorder %s22, 0
      %p106 = por %p104, %p105
      %p107 = scmp.ne.s32.totalorder %s95, %s96
      %p108 = scmp.eq.s32.totalorder %s23, 1
      %p109 = por %p107, %p108
      %p111 = scmp.ne.s32.totalorder %s96, %s110
      %p112 = scmp.eq.s32.totalorder %s23, 0
      %p113 = por %p111, %p112
      %s114 = ssub.s32 %s17, %s24
      %p115 = scmp.eq.s32.totalorder %s114, 0
      %s117 = sadd.s32 %s116, 1
      %s118 = scalar_select %p115, %s116, %s117
      %p121 = pneg %p115
      %p122 = scmp.eq.s32.totalorder %s17, 1
      %p123 = por %p121, %p122
      %p124 = scmp.ne.s32.totalorder %s116, %s119
      %p125 = scmp.eq.s32.totalorder %s17, 0
      %p126 = por %p124, %p125
      %p127 = scmp.ne.s32.totalorder %s116, %s119
      %p128 = scmp.eq.s32.totalorder %s22, 1
      %p129 = por %p127, %p128
      %p130 = scmp.ne.s32.totalorder %s119, %s120
      %p131 = scmp.eq.s32.totalorder %s22, 0
      %p132 = por %p130, %p131
      %p133 = scmp.ne.s32.totalorder %s119, %s120
      %p134 = scmp.eq.s32.totalorder %s23, 1
      %p135 = por %p133, %p134
      %p137 = scmp.ne.s32.totalorder %s120, %s136
      %p138 = scmp.eq.s32.totalorder %s23, 0
      %p139 = por %p137, %p138
      %p140 = scmp.le.s32.totalorder 1, %s17
      %p141 = scmp.lt.s32.totalorder %s17, 3
      %p142 = pnand %p140, %p141
      %p143 = pneg %p142
      // Predicated region
      $region9: #{tpu_custom_call.1} parent=5 // pred_check
        _
      $region10: #{tpu_custom_call.1} parent=5 // pred_check_branch
        %145 = sbr.rel (%p142) target = $region12
      $region11: #{tpu_custom_call.1} parent=5 // pred_region
        %s146 = ssub.s32 %s17, 1
        // Predicated region
        $region13: #{tpu_custom_call.1} parent=11 // pred_check
          %p147 = pneg %p64
        $region14: #{tpu_custom_call.1} parent=11 // pred_check_branch
          %149 = sbr.rel (%p147) target = $region16
        $region15: #{tpu_custom_call.1} parent=11 // pred_region
          %s151 = ssub.s32 8192, 8192
          %152 = vsyncadd [#allocation6], %s151
          %s153 = sshll.u32 [#allocation5], 4
          %s154 = int_to_ptr.vmem [resolvable:$true] %s153
          %159 = dma.hbm_to_vmem [thread:$0]  %s1, 8192, %s154, [#allocation6], 256, 256, 16
        $region16: #{tpu_custom_call.1} parent=11 // pred_fallthru
          _
        // Predicated region
        $region17: #{tpu_custom_call.1} parent=11 // pred_check
          %p160 = pneg %p85
        $region18: #{tpu_custom_call.1} parent=11 // pred_check_branch
          %162 = sbr.rel (%p160) target = $region20
        $region19: #{tpu_custom_call.1} parent=11 // pred_region
          %s164 = ssub.s32 2048, 2048
          %165 = vsyncadd [#allocation6], %s164
          %s166 = sshll.u32 [#allocation7], 4
          %s167 = int_to_ptr.vmem [resolvable:$true] %s166
          %172 = dma.hbm_to_vmem [thread:$0]  %s2, 2048, %s167, [#allocation6], 128, 128, 8
        $region20: #{tpu_custom_call.1} parent=11 // pred_fallthru
          _
        // Predicated region
        $region21: #{tpu_custom_call.1} parent=11 // pred_check
          %p173 = pneg %p106
        $region22: #{tpu_custom_call.1} parent=11 // pred_check_branch
          %175 = sbr.rel (%p173) target = $region24
        $region23: #{tpu_custom_call.1} parent=11 // pred_region
          _
        $region24: #{tpu_custom_call.1} parent=11 // pred_fallthru
          _
      $region12: #{tpu_custom_call.1} parent=5 // pred_fallthru
        _
      %p176 = scmp.lt.s32.totalorder %s17, 2
      // Predicated region
      $region25: #{tpu_custom_call.1} parent=5 // pred_check
        %p177 = pneg %p176
      $region26: #{tpu_custom_call.1} parent=5 // pred_check_branch
        %179 = sbr.rel (%p177) target = $region28
      $region27: #{tpu_custom_call.1} parent=5 // pred_region
        // Predicated region
        $region29: #{tpu_custom_call.1} parent=27 // pred_check
          %p180 = pneg %p37
        $region30: #{tpu_custom_call.1} parent=27 // pred_check_branch
          %182 = sbr.rel (%p180) target = $region32
        $region31: #{tpu_custom_call.1} parent=27 // pred_region
          %s183 = sand.u32 %s27, 1
          %s184 = scalar_lea.sflag [#allocation3], %s183
          %s185 = sand.u32 %s27, 1
          %s186 = smul.addr %s185, 16
          %s187 = scalar_lea.vmem [#allocation2], %s186
          %s189 = ssub.s32 256, 256
          %190 = vsyncadd %s184, %s189
          %s191 = smul.addr %s17, 2
          %s192 = smul.addr %s191, 128
          %s193 = scalar_lea.hbm %s0, %s192
          %s195 = sshll.u32 %s187, 4
          %s196 = int_to_ptr.vmem [resolvable:$true] %s195
          %198 = dma.hbm_to_vmem [thread:$0]  %s193, 256, %s196, %s184
        $region32: #{tpu_custom_call.1} parent=27 // pred_fallthru
          _
      $region28: #{tpu_custom_call.1} parent=5 // pred_fallthru
        _
      %p199 = scmp.le.s32.totalorder 1, %s17
      %p200 = scmp.lt.s32.totalorder %s17, 3
      %p201 = pnand %p199, %p200
      %p202 = pneg %p201
      // Predicated region
      $region33: #{tpu_custom_call.1} parent=5 // pred_check
        _
      $region34: #{tpu_custom_call.1} parent=5 // pred_check_branch
        %204 = sbr.rel (%p201) target = $region36
      $region35: #{tpu_custom_call.1} parent=5 // pred_region
        %s205 = ssub.s32 %s17, 1
        %s206 = sand.u32 %s30, 1
        %s207 = scalar_lea.sflag [#allocation3], %s206
        %s208 = sand.u32 %s30, 1
        %s209 = smul.addr %s208, 16
        %s210 = scalar_lea.vmem [#allocation2], %s209
        // Predicated region
        $region37: #{tpu_custom_call.1} parent=35 // pred_check
          %p211 = pneg %p43
        $region38: #{tpu_custom_call.1} parent=35 // pred_check_branch
          %213 = sbr.rel (%p211) target = $region40
        $region39: #{tpu_custom_call.1} parent=35 // pred_region
          %214 = dma.done %s207, 256
        $region40: #{tpu_custom_call.1} parent=35 // pred_fallthru
          _
        // Predicated region
        $region41: #{tpu_custom_call.1} parent=35 // pred_check
          %p215 = pneg %p64
        $region42: #{tpu_custom_call.1} parent=35 // pred_check_branch
          %217 = sbr.rel (%p215) target = $region44
        $region43: #{tpu_custom_call.1} parent=35 // pred_region
          %218 = dma.done [#allocation6], 8192
        $region44: #{tpu_custom_call.1} parent=35 // pred_fallthru
          _
        // Predicated region
        $region45: #{tpu_custom_call.1} parent=35 // pred_check
          %p219 = pneg %p85
        $region46: #{tpu_custom_call.1} parent=35 // pred_check_branch
          %221 = sbr.rel (%p219) target = $region48
        $region47: #{tpu_custom_call.1} parent=35 // pred_region
          %222 = dma.done [#allocation6], 2048
        $region48: #{tpu_custom_call.1} parent=35 // pred_fallthru
          _
        %s223 = sand.u32 %s30, 1
        %s224 = scalar_lea.sflag [#allocation3], %s223
        %s225 = sand.u32 %s30, 1
        %s226 = smul.addr %s225, 16
        %s227 = scalar_lea.vmem [#allocation2], %s226
        %p228 = pneg %p43
        %p229 = pneg %p40
        %p230 = pneg %p64
        %p231 = pneg %p61
        %p232 = pneg %p85
        %p233 = pneg %p82
        %p234 = pneg %p106
        %p235 = pneg %p103
        %p236 = pneg %p132
        %p237 = pneg %p129
        %s238 = sand.u32 %s119, 1
        %s239 = scalar_lea.sflag [#allocation4], %s238
        %s240 = sand.u32 %s119, 1
        %s241 = smul.addr %s240, 8
        %s242 = scalar_lea.vmem [#allocation8], %s241
        %v243 = vld [vmem:[%s210] sm:$0xff]
        %v244 = vld [vmem:[%s210 + $0x8] sm:$0xff]
        %v245 = vld [vmem:[#allocation5] sm:$0xff]
        %v246 = vld [vmem:[#allocation5 + $0x8] sm:$0xff]
        %v247 = vld [vmem:[#allocation5 + $0x10] sm:$0xff]
        %v248 = vld [vmem:[#allocation5 + $0x18] sm:$0xff]
        %v249 = vld [vmem:[#allocation5 + $0x20] sm:$0xff]
        %v250 = vld [vmem:[#allocation5 + $0x28] sm:$0xff]
        %v251 = vld [vmem:[#allocation5 + $0x30] sm:$0xff]
        %v252 = vld [vmem:[#allocation5 + $0x38] sm:$0xff]
        %v253 = vld [vmem:[#allocation5 + $0x40] sm:$0xff]
        %v254 = vld [vmem:[#allocation5 + $0x48] sm:$0xff]
        %v255 = vld [vmem:[#allocation5 + $0x50] sm:$0xff]
        %v256 = vld [vmem:[#allocation5 + $0x58] sm:$0xff]
        %v257 = vld [vmem:[#allocation5 + $0x60] sm:$0xff]
        %v258 = vld [vmem:[#allocation5 + $0x68] sm:$0xff]
        %v259 = vld [vmem:[#allocation5 + $0x70] sm:$0xff]
        %v260 = vld [vmem:[#allocation5 + $0x78] sm:$0xff]
        %v261 = vld [vmem:[#allocation5 + $0x80] sm:$0xff]
        %v262 = vld [vmem:[#allocation5 + $0x88] sm:$0xff]
        %v263 = vld [vmem:[#allocation5 + $0x90] sm:$0xff]
        %v264 = vld [vmem:[#allocation5 + $0x98] sm:$0xff]
        %v265 = vld [vmem:[#allocation5 + $0xa0] sm:$0xff]
        %v266 = vld [vmem:[#allocation5 + $0xa8] sm:$0xff]
        %v267 = vld [vmem:[#allocation5 + $0xb0] sm:$0xff]
        %v268 = vld [vmem:[#allocation5 + $0xb8] sm:$0xff]
        %v269 = vld [vmem:[#allocation5 + $0xc0] sm:$0xff]
        %v270 = vld [vmem:[#allocation5 + $0xc8] sm:$0xff]
        %v271 = vld [vmem:[#allocation5 + $0xd0] sm:$0xff]
        %v272 = vld [vmem:[#allocation5 + $0xd8] sm:$0xff]
        %v273 = vld [vmem:[#allocation5 + $0xe0] sm:$0xff]
        %v274 = vld [vmem:[#allocation5 + $0xe8] sm:$0xff]
        %v275 = vld [vmem:[#allocation5 + $0xf0] sm:$0xff]
        %v276 = vld [vmem:[#allocation5 + $0xf8] sm:$0xff]
        %v277 = vld [vmem:[#allocation5 + $0x100] sm:$0xff]
        %v278 = vld [vmem:[#allocation5 + $0x108] sm:$0xff]
        %v279 = vld [vmem:[#allocation5 + $0x110] sm:$0xff]
        %v280 = vld [vmem:[#allocation5 + $0x118] sm:$0xff]
        %v281 = vld [vmem:[#allocation5 + $0x120] sm:$0xff]
        %v282 = vld [vmem:[#allocation5 + $0x128] sm:$0xff]
        %v283 = vld [vmem:[#allocation5 + $0x130] sm:$0xff]
        %v284 = vld [vmem:[#allocation5 + $0x138] sm:$0xff]
        %v285 = vld [vmem:[#allocation5 + $0x140] sm:$0xff]
        %v286 = vld [vmem:[#allocation5 + $0x148] sm:$0xff]
        %v287 = vld [vmem:[#allocation5 + $0x150] sm:$0xff]
        %v288 = vld [vmem:[#allocation5 + $0x158] sm:$0xff]
        %v289 = vld [vmem:[#allocation5 + $0x160] sm:$0xff]
        %v290 = vld [vmem:[#allocation5 + $0x168] sm:$0xff]
        %v291 = vld [vmem:[#allocation5 + $0x170] sm:$0xff]
        %v292 = vld [vmem:[#allocation5 + $0x178] sm:$0xff]
        %v293 = vld [vmem:[#allocation5 + $0x180] sm:$0xff]
        %v294 = vld [vmem:[#allocation5 + $0x188] sm:$0xff]
        %v295 = vld [vmem:[#allocation5 + $0x190] sm:$0xff]
        %v296 = vld [vmem:[#allocation5 + $0x198] sm:$0xff]
        %v297 = vld [vmem:[#allocation5 + $0x1a0] sm:$0xff]
        %v298 = vld [vmem:[#allocation5 + $0x1a8] sm:$0xff]
        %v299 = vld [vmem:[#allocation5 + $0x1b0] sm:$0xff]
        %v300 = vld [vmem:[#allocation5 + $0x1b8] sm:$0xff]
        %v301 = vld [vmem:[#allocation5 + $0x1c0] sm:$0xff]
        %v302 = vld [vmem:[#allocation5 + $0x1c8] sm:$0xff]
        %v303 = vld [vmem:[#allocation5 + $0x1d0] sm:$0xff]
        %v304 = vld [vmem:[#allocation5 + $0x1d8] sm:$0xff]
        %v305 = vld [vmem:[#allocation5 + $0x1e0] sm:$0xff]
        %v306 = vld [vmem:[#allocation5 + $0x1e8] sm:$0xff]
        %v307 = vld [vmem:[#allocation5 + $0x1f0] sm:$0xff]
        %v308 = vld [vmem:[#allocation5 + $0x1f8] sm:$0xff]
        %309 = vmatprep.subr.mxu0 %v276
        %310 = vmatpush1.msra.mxu0 %v275
        %311 = vmatprep.subr.mxu0 %v274
        %312 = vmatpush1.msra.mxu0 %v273
        %313 = vmatprep.subr.mxu0 %v272
        %314 = vmatpush1.msra.mxu0 %v271
        %315 = vmatprep.subr.mxu0 %v270
        %316 = vmatpush1.msra.mxu0 %v269
        %317 = vmatprep.subr.mxu0 %v268
        %318 = vmatpush1.msra.mxu0 %v267
        %319 = vmatprep.subr.mxu0 %v266
        %320 = vmatpush1.msra.mxu0 %v265
        %321 = vmatprep.subr.mxu0 %v264
        %322 = vmatpush1.msra.mxu0 %v263
        %323 = vmatprep.subr.mxu0 %v262
        %324 = vmatpush1.msra.mxu0 %v261
        %325 = vmatprep.subr.mxu0 %v260
        %326 = vmatpush1.msra.mxu0 %v259
        %327 = vmatprep.subr.mxu0 %v258
        %328 = vmatpush1.msra.mxu0 %v257
        %329 = vmatprep.subr.mxu0 %v256
        %330 = vmatpush1.msra.mxu0 %v255
        %331 = vmatprep.subr.mxu0 %v254
        %332 = vmatpush1.msra.mxu0 %v253
        %333 = vmatprep.subr.mxu0 %v252
        %334 = vmatpush1.msra.mxu0 %v251
        %335 = vmatprep.subr.mxu0 %v250
        %336 = vmatpush1.msra.mxu0 %v249
        %337 = vmatprep.subr.mxu0 %v248
        %338 = vmatpush1.msra.mxu0 %v247
        %339 = vmatprep.subr.mxu0 %v246
        %340 = vmatpush1.msra.mxu0 %v245
        %341 = vmatprep.subr.mxu0 %v308
        %342 = vmatpush2.msra.mxu0 %v307
        %343 = vmatprep.subr.mxu0 %v306
        %344 = vmatpush2.msra.mxu0 %v305
        %345 = vmatprep.subr.mxu0 %v304
        %346 = vmatpush2.msra.mxu0 %v303
        %347 = vmatprep.subr.mxu0 %v302
        %348 = vmatpush2.msra.mxu0 %v301
        %349 = vmatprep.subr.mxu0 %v300
        %350 = vmatpush2.msra.mxu0 %v299
        %351 = vmatprep.subr.mxu0 %v298
        %352 = vmatpush2.msra.mxu0 %v297
        %353 = vmatprep.subr.mxu0 %v296
        %354 = vmatpush2.msra.mxu0 %v295
        %355 = vmatprep.subr.mxu0 %v294
        %356 = vmatpush2.msra.mxu0 %v293
        %357 = vmatprep.subr.mxu0 %v292
        %358 = vmatpush2.msra.mxu0 %v291
        %359 = vmatprep.subr.mxu0 %v290
        %360 = vmatpush2.msra.mxu0 %v289
        %361 = vmatprep.subr.mxu0 %v288
        %362 = vmatpush2.msra.mxu0 %v287
        %363 = vmatprep.subr.mxu0 %v286
        %364 = vmatpush2.msra.mxu0 %v285
        %365 = vmatprep.subr.mxu0 %v284
        %366 = vmatpush2.msra.mxu0 %v283
        %367 = vmatprep.subr.mxu0 %v282
        %368 = vmatpush2.msra.mxu0 %v281
        %369 = vmatprep.subr.mxu0 %v280
        %370 = vmatpush2.msra.mxu0 %v279
        %371 = vmatprep.subr.mxu0 %v278
        %372 = vmatpush2.msra.mxu0 %v277
        %373 = vmatprep.mubr.f32.mxu0 %v244
        %374 = vmatmul.mubr.f32.gmra.mxu0 %v243
        %v375 = vpop.f32.mrf.mxu0
        %v376 = vadd.f32 0.0, %v375
        %v377 = vpop.f32.mrf.mxu0
        %v378 = vadd.f32 0.0, %v377
        %379 = vdwg.mxu0
        %v380 = vmul.f32 %v376, %v376
        %v381 = vmul.f32 %v378, %v378
        %v382 = vlaneseq
        %v383 = vand.u32 %v382, 127
        %vm384 = vcmp.eq.s32.totalorder %v383, 0
        %v385 = vsel %vm384, 0.0, %v381
        %v386 = vadd.f32 %v380, %v385
        %v387 = vrsqrt.pop %v386
        %v388 = vmul.f32 %v386, %v387
        %vm389 = vcmp.eq.f32.partialorder %v386, inf
        %v390 = vsel %vm389, %v386, %v388
        %vm391 = vcmp.eq.f32.partialorder %v386, 0.0
        %v392 = vand.u32 %v386, 2147483648
        %v393 = vsel %vm391, %v392, %v390
        %v394 = vld [vmem:[#allocation7] sm:$0xff]
        %v395 = vld [vmem:[#allocation7 + $0x8] sm:$0xff]
        %v396 = vld [vmem:[#allocation7 + $0x10] sm:$0xff]
        %v397 = vld [vmem:[#allocation7 + $0x18] sm:$0xff]
        %v398 = vld [vmem:[#allocation7 + $0x20] sm:$0xff]
        %v399 = vld [vmem:[#allocation7 + $0x28] sm:$0xff]
        %v400 = vld [vmem:[#allocation7 + $0x30] sm:$0xff]
        %v401 = vld [vmem:[#allocation7 + $0x38] sm:$0xff]
        %v402 = vld [vmem:[#allocation7 + $0x40] sm:$0xff]
        %v403 = vld [vmem:[#allocation7 + $0x48] sm:$0xff]
        %v404 = vld [vmem:[#allocation7 + $0x50] sm:$0xff]
        %v405 = vld [vmem:[#allocation7 + $0x58] sm:$0xff]
        %v406 = vld [vmem:[#allocation7 + $0x60] sm:$0xff]
        %v407 = vld [vmem:[#allocation7 + $0x68] sm:$0xff]
        %v408 = vld [vmem:[#allocation7 + $0x70] sm:$0xff]
        %v409 = vld [vmem:[#allocation7 + $0x78] sm:$0xff]
        %v410 = vand.u32 2147483647, %v378
        %v411 = vld [vmem:[%s3] sm:$0x1]
        %413 = vset.pattern.permute.xlu0 0
        %414 = vperm.xlu0 %413, %v410
        %v415 = vpop.permute.xlu0 %414
        %v418 = vlaneseq
        %v419 = vshrl.u32 %v418, 7
        %v420 = vsub.s32 0, %v419
        %v421 = vrot.slane %v411, %v420
        %v423 = vmul.f32 %v415, %v421
        %424 = vmatprep.subr.mxu0 0.0
        %425 = vmatpush1.msra.mxu0 %v409
        %426 = vmatprep.subr.mxu0 0.0
        %427 = vmatpush1.msra.mxu0 %v408
        %428 = vmatprep.subr.mxu0 0.0
        %429 = vmatpush1.msra.mxu0 %v407
        %430 = vmatprep.subr.mxu0 0.0
        %431 = vmatpush1.msra.mxu0 %v406
        %432 = vmatprep.subr.mxu0 0.0
        %433 = vmatpush1.msra.mxu0 %v405
        %434 = vmatprep.subr.mxu0 0.0
        %435 = vmatpush1.msra.mxu0 %v404
        %436 = vmatprep.subr.mxu0 0.0
        %437 = vmatpush1.msra.mxu0 %v403
        %438 = vmatprep.subr.mxu0 0.0
        %439 = vmatpush1.msra.mxu0 %v402
        %440 = vmatprep.subr.mxu0 0.0
        %441 = vmatpush1.msra.mxu0 %v401
        %442 = vmatprep.subr.mxu0 0.0
        %443 = vmatpush1.msra.mxu0 %v400
        %444 = vmatprep.subr.mxu0 0.0
        %445 = vmatpush1.msra.mxu0 %v399
        %446 = vmatprep.subr.mxu0 0.0
        %447 = vmatpush1.msra.mxu0 %v398
        %448 = vmatprep.subr.mxu0 0.0
        %449 = vmatpush1.msra.mxu0 %v397
        %450 = vmatprep.subr.mxu0 0.0
        %451 = vmatpush1.msra.mxu0 %v396
        %452 = vmatprep.subr.mxu0 0.0
        %453 = vmatpush1.msra.mxu0 %v395
        %454 = vmatprep.subr.mxu0 0.0
        %455 = vmatpush1.msra.mxu0 %v394
        %456 = vmatprep.subr.mxu0 0.0
        %457 = vmatpush2.msra.mxu0 0.0
        %458 = vmatprep.subr.mxu0 0.0
        %459 = vmatpush2.msra.mxu0 0.0
        %460 = vmatprep.subr.mxu0 0.0
        %461 = vmatpush2.msra.mxu0 0.0
        %462 = vmatprep.subr.mxu0 0.0
        %463 = vmatpush2.msra.mxu0 0.0
        %464 = vmatprep.subr.mxu0 0.0
        %465 = vmatpush2.msra.mxu0 0.0
        %466 = vmatprep.subr.mxu0 0.0
        %467 = vmatpush2.msra.mxu0 0.0
        %468 = vmatprep.subr.mxu0 0.0
        %469 = vmatpush2.msra.mxu0 0.0
        %470 = vmatprep.subr.mxu0 0.0
        %471 = vmatpush2.msra.mxu0 0.0
        %472 = vmatprep.subr.mxu0 0.0
        %473 = vmatpush2.msra.mxu0 0.0
        %474 = vmatprep.subr.mxu0 0.0
        %475 = vmatpush2.msra.mxu0 0.0
        %476 = vmatprep.subr.mxu0 0.0
        %477 = vmatpush2.msra.mxu0 0.0
        %478 = vmatprep.subr.mxu0 0.0
        %479 = vmatpush2.msra.mxu0 0.0
        %480 = vmatprep.subr.mxu0 0.0
        %481 = vmatpush2.msra.mxu0 0.0
        %482 = vmatprep.subr.mxu0 0.0
        %483 = vmatpush2.msra.mxu0 0.0
        %484 = vmatprep.subr.mxu0 0.0
        %485 = vmatpush2.msra.mxu0 0.0
        %486 = vmatprep.subr.mxu0 0.0
        %487 = vmatpush2.msra.mxu0 0.0
        %488 = vmatprep.mubr.f32.mxu0 0.0
        %489 = vmatmul.mubr.f32.gmra.mxu0 %v393
        %v490 = vpop.f32.mrf.mxu0
        %v491 = vadd.f32 %v423, %v490
        %v492 = vpop.f32.mrf.mxu0
        %493 = vdwg.mxu0
        %v494 = vmax.f32 %v491, 1e-05
        %v495 = vlog2.pop %v494
        %v496 = vmul.f32 %v495, 0.6931472
        %v497 = vmul.f32 %v496, 0.4342945
        %498 = vst [vmem:[%s242] sm:$0xff] %v497
        %s499 = sand.u32 %s119, 1
        %s500 = scalar_lea.sflag [#allocation4], %s499
        %s501 = sand.u32 %s119, 1
        %s502 = smul.addr %s501, 8
        %s503 = scalar_lea.vmem [#allocation8], %s502
        // Predicated region
        $region49: #{tpu_custom_call.1} parent=35 // pred_check
          %p504 = pneg %p129
        $region50: #{tpu_custom_call.1} parent=35 // pred_check_branch
          %506 = sbr.rel (%p504) target = $region52
        $region51: #{tpu_custom_call.1} parent=35 // pred_region
          %s508 = ssub.s32 128, 128
          %509 = vsyncadd %s500, %s508
          %s510 = smul.addr %s22, 128
          %s511 = scalar_lea.hbm %s4, %s510
          %s513 = sshll.u32 %s503, 4
          %s514 = int_to_ptr.vmem [resolvable:$true] %s513
          %516 = dma.vmem_to_hbm [thread:$0]  %s514, 128, %s511, %s500
        $region52: #{tpu_custom_call.1} parent=35 // pred_fallthru
          _
      $region36: #{tpu_custom_call.1} parent=5 // pred_fallthru
        _
      %p517 = scmp.le.s32.totalorder 2, %s17
      // Predicated region
      $region53: #{tpu_custom_call.1} parent=5 // pred_check
        %p518 = pneg %p517
      $region54: #{tpu_custom_call.1} parent=5 // pred_check_branch
        %520 = sbr.rel (%p518) target = $region56
      $region55: #{tpu_custom_call.1} parent=5 // pred_region
        %s521 = ssub.s32 %s17, 2
        // Predicated region
        $region57: #{tpu_custom_call.1} parent=55 // pred_check
          %p522 = pneg %p135
        $region58: #{tpu_custom_call.1} parent=55 // pred_check_branch
          %524 = sbr.rel (%p522) target = $region60
        $region59: #{tpu_custom_call.1} parent=55 // pred_region
          %s525 = sand.u32 %s120, 1
          %s526 = scalar_lea.sflag [#allocation4], %s525
          %s527 = sand.u32 %s120, 1
          %s528 = smul.addr %s527, 8
          %s529 = scalar_lea.vmem [#allocation8], %s528
          %530 = dma.done %s526, 128
        $region60: #{tpu_custom_call.1} parent=55 // pred_fallthru
          _
      $region56: #{tpu_custom_call.1} parent=5 // pred_fallthru
        _
    $region6: #{tpu_custom_call.1} parent=1 // loop_footer
      %s21 = sadd.s32 1, %s17
    $region7: #{tpu_custom_call.1} parent=1 // loop_footer_branch
      %16 = sbr.rel target = $region3
    $region8: #{tpu_custom_call.1} parent=1 // loop_exit
      _
    %531 = vsyncpa [#allocation3], 1
    %s532 = scalar_lea.sflag [#allocation3], 1
    %533 = vsyncpa %s532, 1
    %534 = vsyncpa [#allocation6], 1
    %535 = vsyncpa [#allocation4], 1
    %s536 = scalar_lea.sflag [#allocation4], 1
    %537 = vsyncpa %s536, 1

// kernel: tpu_custom_call.1
$region0: #{tpu_custom_call.1}
  #allocation0 [shape = 'u32[]', space=smem, size = 0x4, offset = 0x4, fixed_abs, tag = 'smem constant byte address 0x4 - core index']
  #allocation1 [shape = 'u32[144,128]{1,0:T(1,128)}', space=vmem, size = 0x12000, scoped, tag = 'internal scratch']
  %s0 = inlined_call_operand.hbm [shape: f32[16,256], index: 0, kind: input, shape index: {}]
  %s1 = inlined_call_operand.hbm [shape: f32[256,256], index: 1, kind: input, shape index: {}]
  %s2 = inlined_call_operand.hbm [shape: f32[128,128], index: 2, kind: input, shape index: {}]
  %s3 = inlined_call_operand.vmem [shape: f32[1,128], index: 3, kind: input, shape index: {}]
  %s4 = inlined_call_operand.hbm [shape: f32[16,128], index: 4, kind: output, shape index: {}]
  %s5 = sld [smem:[#allocation0]]
  $region61: #{tpu_custom_call.1} parent=0
    _
  %s7 = ssub.s32 1, %s5
  %s8 = scalar_select 0, %s7, %s5
  $region1: #{tpu_custom_call.1} parent=0
    #allocation2 [shape = 'u8[16384]{0}', space=vmem, size = 0x4000, scoped, tag = 'input window, operand 0']
    #allocation3 [shape = 's32[2]{0}', space=sflag, size = 0x8, scoped, tag = 'scoped memory for tpu_custom_call.1']
    #allocation4 [shape = 's32[2]{0}', space=sflag, size = 0x8, scoped, tag = 'scoped memory for tpu_custom_call.1']
    #allocation5 [shape = 'u8[262144]{0}', space=vmem, size = 0x40000, scoped, tag = 'input window, operand 1, single buffered']
    #allocation6 [shape = 's32[1]{0}', space=sflag, size = 0x4, scoped, tag = 'scoped memory for tpu_custom_call.1']
    #allocation7 [shape = 'u8[65536]{0}', space=vmem, size = 0x10000, scoped, tag = 'input window, operand 2, single buffered']
    #allocation8 [shape = 'u8[8192]{0}', space=vmem, size = 0x2000, scoped, tag = 'output window, operand 0']
    %9 = vsyncpa [#allocation3], 0
    %s10 = scalar_lea.sflag [#allocation3], 1
    %11 = vsyncpa %s10, 0
    %12 = vsyncpa [#allocation6], 0
    %13 = vsyncpa [#allocation4], 0
    %s14 = scalar_lea.sflag [#allocation4], 1
    %15 = vsyncpa %s14, 0
    loop: start=0, step=1, limit=4
    $region2: #{tpu_custom_call.1} parent=1 // loop_pre_header
      _
    $region3: #{tpu_custom_call.1} parent=1 // loop_header
      %s17 = sphi 0, %s21
      %p18 = scmp.ge.s32.totalorder %s17, 4
      %s27 = sphi 0, %s29
      %s30 = sphi 0, %s27
      %s31 = sphi 0, %s30
      %s47 = sphi 0, %s31
      %s51 = sphi 0, %s51
      %s53 = sphi 0, %s51
      %s54 = sphi 0, %s53
      %s68 = sphi 0, %s54
      %s72 = sphi 0, %s72
      %s74 = sphi 0, %s72
      %s75 = sphi 0, %s74
      %s89 = sphi 0, %s75
      %s93 = sphi 0, %s93
      %s95 = sphi 0, %s93
      %s96 = sphi 0, %s95
      %s110 = sphi 0, %s96
      %s116 = sphi 0, %s118
      %s119 = sphi 0, %s116
      %s120 = sphi 0, %s119
      %s136 = sphi 0, %s120
    $region4: #{tpu_custom_call.1} parent=1 // loop_header_branch
      %20 = sbr.rel (%p18) target = $region8
    $region5: #{tpu_custom_call.1} parent=1 // loop_body
      %s22 = ssub.s32 %s17, 1
      %s23 = ssub.s32 %s17, 2
      %s24 = sadd.s32 %s17, 1
      %s25 = ssub.s32 %s17, %s24
      %p26 = scmp.eq.s32.totalorder %s25, 0
      %s28 = sadd.s32 %s27, 1
      %s29 = scalar_select %p26, %s27, %s28
      %p32 = pneg %p26
      %p33 = scmp.eq.s32.totalorder %s17, 1
      %p34 = por %p32, %p33
      %p35 = scmp.ne.s32.totalorder %s27, %s30
      %p36 = scmp.eq.s32.totalorder %s17, 0
      %p37 = por %p35, %p36
      %p38 = scmp.ne.s32.totalorder %s27, %s30
      %p39 = scmp.eq.s32.totalorder %s22, 1
      %p40 = por %p38, %p39
      %p41 = scmp.ne.s32.totalorder %s30, %s31
      %p42 = scmp.eq.s32.totalorder %s22, 0
      %p43 = por %p41, %p42
      %p44 = scmp.ne.s32.totalorder %s30, %s31
      %p45 = scmp.eq.s32.totalorder %s23, 1
      %p46 = por %p44, %p45
      %p48 = scmp.ne.s32.totalorder %s31, %s47
      %p49 = scmp.eq.s32.totalorder %s23, 0
      %p50 = por %p48, %p49
      %s52 = sadd.s32 %s51, 1
      %p55 = scmp.eq.s32.totalorder %s17, 1
      %p56 = scmp.ne.s32.totalorder %s51, %s53
      %p57 = scmp.eq.s32.totalorder %s17, 0
      %p58 = por %p56, %p57
      %p59 = scmp.ne.s32.totalorder %s51, %s53
      %p60 = scmp.eq.s32.totalorder %s22, 1
      %p61 = por %p59, %p60
      %p62 = scmp.ne.s32.totalorder %s53, %s54
      %p63 = scmp.eq.s32.totalorder %s22, 0
      %p64 = por %p62, %p63
      %p65 = scmp.ne.s32.totalorder %s53, %s54
      %p66 = scmp.eq.s32.totalorder %s23, 1
      %p67 = por %p65, %p66
      %p69 = scmp.ne.s32.totalorder %s54, %s68
      %p70 = scmp.eq.s32.totalorder %s23, 0
      %p71 = por %p69, %p70
      %s73 = sadd.s32 %s72, 1
      %p76 = scmp.eq.s32.totalorder %s17, 1
      %p77 = scmp.ne.s32.totalorder %s72, %s74
      %p78 = scmp.eq.s32.totalorder %s17, 0
      %p79 = por %p77, %p78
      %p80 = scmp.ne.s32.totalorder %s72, %s74
      %p81 = scmp.eq.s32.totalorder %s22, 1
      %p82 = por %p80, %p81
      %p83 = scmp.ne.s32.totalorder %s74, %s75
      %p84 = scmp.eq.s32.totalorder %s22, 0
      %p85 = por %p83, %p84
      %p86 = scmp.ne.s32.totalorder %s74, %s75
      %p87 = scmp.eq.s32.totalorder %s23, 1
      %p88 = por %p86, %p87
      %p90 = scmp.ne.s32.totalorder %s75, %s89
      %p91 = scmp.eq.s32.totalorder %s23, 0
      %p92 = por %p90, %p91
      %s94 = sadd.s32 %s93, 1
      %p97 = scmp.eq.s32.totalorder %s17, 1
      %p98 = scmp.ne.s32.totalorder %s93, %s95
      %p99 = scmp.eq.s32.totalorder %s17, 0
      %p100 = por %p98, %p99
      %p101 = scmp.ne.s32.totalorder %s93, %s95
      %p102 = scmp.eq.s32.totalorder %s22, 1
      %p103 = por %p101, %p102
      %p104 = scmp.ne.s32.totalorder %s95, %s96
      %p105 = scmp.eq.s32.totalorder %s22, 0
      %p106 = por %p104, %p105
      %p107 = scmp.ne.s32.totalorder %s95, %s96
      %p108 = scmp.eq.s32.totalorder %s23, 1
      %p109 = por %p107, %p108
      %p111 = scmp.ne.s32.totalorder %s96, %s110
      %p112 = scmp.eq.s32.totalorder %s23, 0
      %p113 = por %p111, %p112
      %s114 = ssub.s32 %s17, %s24
      %p115 = scmp.eq.s32.totalorder %s114, 0
      %s117 = sadd.s32 %s116, 1
      %s118 = scalar_select %p115, %s116, %s117
      %p121 = pneg %p115
      %p122 = scmp.eq.s32.totalorder %s17, 1
      %p123 = por %p121, %p122
      %p124 = scmp.ne.s32.totalorder %s116, %s119
      %p125 = scmp.eq.s32.totalorder %s17, 0
      %p126 = por %p124, %p125
      %p127 = scmp.ne.s32.totalorder %s116, %s119
      %p128 = scmp.eq.s32.totalorder %s22, 1
      %p129 = por %p127, %p128
      %p130 = scmp.ne.s32.totalorder %s119, %s120
      %p131 = scmp.eq.s32.totalorder %s22, 0
      %p132 = por %p130, %p131
      %p133 = scmp.ne.s32.totalorder %s119, %s120
      %p134 = scmp.eq.s32.totalorder %s23, 1
      %p135 = por %p133, %p134
      %p137 = scmp.ne.s32.totalorder %s120, %s136
      %p138 = scmp.eq.s32.totalorder %s23, 0
      %p139 = por %p137, %p138
      %p140 = scmp.le.s32.totalorder 1, %s17
      %p141 = scmp.lt.s32.totalorder %s17, 3
      %p142 = pnand %p140, %p141
      %p143 = pneg %p142
      // Predicated region
      $region9: #{tpu_custom_call.1} parent=5 // pred_check
        _
      $region10: #{tpu_custom_call.1} parent=5 // pred_check_branch
        %145 = sbr.rel (%p142) target = $region12
      $region11: #{tpu_custom_call.1} parent=5 // pred_region
        %s146 = ssub.s32 %s17, 1
        // Predicated region
        $region13: #{tpu_custom_call.1} parent=11 // pred_check
          %p147 = pneg %p64
        $region14: #{tpu_custom_call.1} parent=11 // pred_check_branch
          %149 = sbr.rel (%p147) target = $region16
        $region15: #{tpu_custom_call.1} parent=11 // pred_region
          %s151 = ssub.s32 8192, 8192
          %152 = vsyncadd [#allocation6], %s151
          %s153 = sshll.u32 [#allocation5], 4
          %s154 = int_to_ptr.vmem [resolvable:$true] %s153
          %159 = dma.hbm_to_vmem [thread:$0]  %s1, 8192, %s154, [#allocation6], 256, 256, 16
        $region16: #{tpu_custom_call.1} parent=11 // pred_fallthru
          _
        // Predicated region
        $region17: #{tpu_custom_call.1} parent=11 // pred_check
          %p160 = pneg %p85
        $region18: #{tpu_custom_call.1} parent=11 // pred_check_branch
          %162 = sbr.rel (%p160) target = $region20
        $region19: #{tpu_custom_call.1} parent=11 // pred_region
          %s164 = ssub.s32 2048, 2048
          %165 = vsyncadd [#allocation6], %s164
          %s166 = sshll.u32 [#allocation7], 4
          %s167 = int_to_ptr.vmem [resolvable:$true] %s166
          %172 = dma.hbm_to_vmem [thread:$0]  %s2, 2048, %s167, [#allocation6], 128, 128, 8
        $region20: #{tpu_custom_call.1} parent=11 // pred_fallthru
          _
        // Predicated region
        $region21: #{tpu_custom_call.1} parent=11 // pred_check
          %p173 = pneg %p106
        $region22: #{tpu_custom_call.1} parent=11 // pred_check_branch
          %175 = sbr.rel (%p173) target = $region24
        $region23: #{tpu_custom_call.1} parent=11 // pred_region
          _
        $region24: #{tpu_custom_call.1} parent=11 // pred_fallthru
          _
      $region12: #{tpu_custom_call.1} parent=5 // pred_fallthru
        _
      %p176 = scmp.lt.s32.totalorder %s17, 2
      // Predicated region
      $region25: #{tpu_custom_call.1} parent=5 // pred_check
        %p177 = pneg %p176
      $region26: #{tpu_custom_call.1} parent=5 // pred_check_branch
        %179 = sbr.rel (%p177) target = $region28
      $region27: #{tpu_custom_call.1} parent=5 // pred_region
        // Predicated region
        $region29: #{tpu_custom_call.1} parent=27 // pred_check
          %p180 = pneg %p37
        $region30: #{tpu_custom_call.1} parent=27 // pred_check_branch
          %182 = sbr.rel (%p180) target = $region32
        $region31: #{tpu_custom_call.1} parent=27 // pred_region
          %s183 = sand.u32 %s27, 1
          %s184 = scalar_lea.sflag [#allocation3], %s183
          %s185 = sand.u32 %s27, 1
          %s186 = smul.addr %s185, 16
          %s187 = scalar_lea.vmem [#allocation2], %s186
          %s189 = ssub.s32 256, 256
          %190 = vsyncadd %s184, %s189
          %s191 = smul.addr %s17, 2
          %s192 = smul.addr %s191, 128
          %s193 = scalar_lea.hbm %s0, %s192
          %s195 = sshll.u32 %s187, 4
          %s196 = int_to_ptr.vmem [resolvable:$true] %s195
          %198 = dma.hbm_to_vmem [thread:$0]  %s193, 256, %s196, %s184
        $region32: #{tpu_custom_call.1} parent=27 // pred_fallthru
          _
      $region28: #{tpu_custom_call.1} parent=5 // pred_fallthru
        _
      %p199 = scmp.le.s32.totalorder 1, %s17
      %p200 = scmp.lt.s32.totalorder %s17, 3
      %p201 = pnand %p199, %p200
      %p202 = pneg %p201
      // Predicated region
      $region33: #{tpu_custom_call.1} parent=5 // pred_check
        _
      $region34: #{tpu_custom_call.1} parent=5 // pred_check_branch
        %204 = sbr.rel (%p201) target = $region36
      $region35: #{tpu_custom_call.1} parent=5 // pred_region
        %s205 = ssub.s32 %s17, 1
        %s206 = sand.u32 %s30, 1
        %s207 = scalar_lea.sflag [#allocation3], %s206
        %s208 = sand.u32 %s30, 1
        %s209 = smul.addr %s208, 16
        %s210 = scalar_lea.vmem [#allocation2], %s209
        // Predicated region
        $region37: #{tpu_custom_call.1} parent=35 // pred_check
          %p211 = pneg %p43
        $region38: #{tpu_custom_call.1} parent=35 // pred_check_branch
          %213 = sbr.rel (%p211) target = $region40
        $region39: #{tpu_custom_call.1} parent=35 // pred_region
          %214 = dma.done %s207, 256
        $region40: #{tpu_custom_call.1} parent=35 // pred_fallthru
          _
        // Predicated region
        $region41: #{tpu_custom_call.1} parent=35 // pred_check
          %p215 = pneg %p64
        $region42: #{tpu_custom_call.1} parent=35 // pred_check_branch
          %217 = sbr.rel (%p215) target = $region44
        $region43: #{tpu_custom_call.1} parent=35 // pred_region
          %218 = dma.done [#allocation6], 8192
        $region44: #{tpu_custom_call.1} parent=35 // pred_fallthru
          _
        // Predicated region
        $region45: #{tpu_custom_call.1} parent=35 // pred_check
          %p219 = pneg %p85
        $region46: #{tpu_custom_call.1} parent=35 // pred_check_branch
          %221 = sbr.rel (%p219) target = $region48
        $region47: #{tpu_custom_call.1} parent=35 // pred_region
          %222 = dma.done [#allocation6], 2048
        $region48: #{tpu_custom_call.1} parent=35 // pred_fallthru
          _
        %s223 = sand.u32 %s30, 1
        %s224 = scalar_lea.sflag [#allocation3], %s223
        %s225 = sand.u32 %s30, 1
        %s226 = smul.addr %s225, 16
        %s227 = scalar_lea.vmem [#allocation2], %s226
        %p228 = pneg %p43
        %p229 = pneg %p40
        %p230 = pneg %p64
        %p231 = pneg %p61
        %p232 = pneg %p85
        %p233 = pneg %p82
        %p234 = pneg %p106
        %p235 = pneg %p103
        %p236 = pneg %p132
        %p237 = pneg %p129
        %s238 = sand.u32 %s119, 1
        %s239 = scalar_lea.sflag [#allocation4], %s238
        %s240 = sand.u32 %s119, 1
        %s241 = smul.addr %s240, 8
        %s242 = scalar_lea.vmem [#allocation8], %s241
        %v243 = vld [vmem:[%s210] sm:$0xff]
        %v244 = vld [vmem:[%s210 + $0x8] sm:$0xff]
        %v245 = vld [vmem:[#allocation5] sm:$0xff]
        %v246 = vld [vmem:[#allocation5 + $0x8] sm:$0xff]
        %v247 = vld [vmem:[#allocation5 + $0x10] sm:$0xff]
        %v248 = vld [vmem:[#allocation5 + $0x18] sm:$0xff]
        %v249 = vld [vmem:[#allocation5 + $0x20] sm:$0xff]
        %v250 = vld [vmem:[#allocation5 + $0x28] sm:$0xff]
        %v251 = vld [vmem:[#allocation5 + $0x30] sm:$0xff]
        %v252 = vld [vmem:[#allocation5 + $0x38] sm:$0xff]
        %v253 = vld [vmem:[#allocation5 + $0x40] sm:$0xff]
        %v254 = vld [vmem:[#allocation5 + $0x48] sm:$0xff]
        %v255 = vld [vmem:[#allocation5 + $0x50] sm:$0xff]
        %v256 = vld [vmem:[#allocation5 + $0x58] sm:$0xff]
        %v257 = vld [vmem:[#allocation5 + $0x60] sm:$0xff]
        %v258 = vld [vmem:[#allocation5 + $0x68] sm:$0xff]
        %v259 = vld [vmem:[#allocation5 + $0x70] sm:$0xff]
        %v260 = vld [vmem:[#allocation5 + $0x78] sm:$0xff]
        %v261 = vld [vmem:[#allocation5 + $0x80] sm:$0xff]
        %v262 = vld [vmem:[#allocation5 + $0x88] sm:$0xff]
        %v263 = vld [vmem:[#allocation5 + $0x90] sm:$0xff]
        %v264 = vld [vmem:[#allocation5 + $0x98] sm:$0xff]
        %v265 = vld [vmem:[#allocation5 + $0xa0] sm:$0xff]
        %v266 = vld [vmem:[#allocation5 + $0xa8] sm:$0xff]
        %v267 = vld [vmem:[#allocation5 + $0xb0] sm:$0xff]
        %v268 = vld [vmem:[#allocation5 + $0xb8] sm:$0xff]
        %v269 = vld [vmem:[#allocation5 + $0xc0] sm:$0xff]
        %v270 = vld [vmem:[#allocation5 + $0xc8] sm:$0xff]
        %v271 = vld [vmem:[#allocation5 + $0xd0] sm:$0xff]
        %v272 = vld [vmem:[#allocation5 + $0xd8] sm:$0xff]
        %v273 = vld [vmem:[#allocation5 + $0xe0] sm:$0xff]
        %v274 = vld [vmem:[#allocation5 + $0xe8] sm:$0xff]
        %v275 = vld [vmem:[#allocation5 + $0xf0] sm:$0xff]
        %v276 = vld [vmem:[#allocation5 + $0xf8] sm:$0xff]
        %v277 = vld [vmem:[#allocation5 + $0x100] sm:$0xff]
        %v278 = vld [vmem:[#allocation5 + $0x108] sm:$0xff]
        %v279 = vld [vmem:[#allocation5 + $0x110] sm:$0xff]
        %v280 = vld [vmem:[#allocation5 + $0x118] sm:$0xff]
        %v281 = vld [vmem:[#allocation5 + $0x120] sm:$0xff]
        %v282 = vld [vmem:[#allocation5 + $0x128] sm:$0xff]
        %v283 = vld [vmem:[#allocation5 + $0x130] sm:$0xff]
        %v284 = vld [vmem:[#allocation5 + $0x138] sm:$0xff]
        %v285 = vld [vmem:[#allocation5 + $0x140] sm:$0xff]
        %v286 = vld [vmem:[#allocation5 + $0x148] sm:$0xff]
        %v287 = vld [vmem:[#allocation5 + $0x150] sm:$0xff]
        %v288 = vld [vmem:[#allocation5 + $0x158] sm:$0xff]
        %v289 = vld [vmem:[#allocation5 + $0x160] sm:$0xff]
        %v290 = vld [vmem:[#allocation5 + $0x168] sm:$0xff]
        %v291 = vld [vmem:[#allocation5 + $0x170] sm:$0xff]
        %v292 = vld [vmem:[#allocation5 + $0x178] sm:$0xff]
        %v293 = vld [vmem:[#allocation5 + $0x180] sm:$0xff]
        %v294 = vld [vmem:[#allocation5 + $0x188] sm:$0xff]
        %v295 = vld [vmem:[#allocation5 + $0x190] sm:$0xff]
        %v296 = vld [vmem:[#allocation5 + $0x198] sm:$0xff]
        %v297 = vld [vmem:[#allocation5 + $0x1a0] sm:$0xff]
        %v298 = vld [vmem:[#allocation5 + $0x1a8] sm:$0xff]
        %v299 = vld [vmem:[#allocation5 + $0x1b0] sm:$0xff]
        %v300 = vld [vmem:[#allocation5 + $0x1b8] sm:$0xff]
        %v301 = vld [vmem:[#allocation5 + $0x1c0] sm:$0xff]
        %v302 = vld [vmem:[#allocation5 + $0x1c8] sm:$0xff]
        %v303 = vld [vmem:[#allocation5 + $0x1d0] sm:$0xff]
        %v304 = vld [vmem:[#allocation5 + $0x1d8] sm:$0xff]
        %v305 = vld [vmem:[#allocation5 + $0x1e0] sm:$0xff]
        %v306 = vld [vmem:[#allocation5 + $0x1e8] sm:$0xff]
        %v307 = vld [vmem:[#allocation5 + $0x1f0] sm:$0xff]
        %v308 = vld [vmem:[#allocation5 + $0x1f8] sm:$0xff]
        %309 = vmatprep.subr.mxu0 %v276
        %310 = vmatpush1.msra.mxu0 %v275
        %311 = vmatprep.subr.mxu0 %v274
        %312 = vmatpush1.msra.mxu0 %v273
        %313 = vmatprep.subr.mxu0 %v272
        %314 = vmatpush1.msra.mxu0 %v271
        %315 = vmatprep.subr.mxu0 %v270
        %316 = vmatpush1.msra.mxu0 %v269
        %317 = vmatprep.subr.mxu0 %v268
        %318 = vmatpush1.msra.mxu0 %v267
        %319 = vmatprep.subr.mxu0 %v266
        %320 = vmatpush1.msra.mxu0 %v265
        %321 = vmatprep.subr.mxu0 %v264
        %322 = vmatpush1.msra.mxu0 %v263
        %323 = vmatprep.subr.mxu0 %v262
        %324 = vmatpush1.msra.mxu0 %v261
        %325 = vmatprep.subr.mxu0 %v260
        %326 = vmatpush1.msra.mxu0 %v259
        %327 = vmatprep.subr.mxu0 %v258
        %328 = vmatpush1.msra.mxu0 %v257
        %329 = vmatprep.subr.mxu0 %v256
        %330 = vmatpush1.msra.mxu0 %v255
        %331 = vmatprep.subr.mxu0 %v254
        %332 = vmatpush1.msra.mxu0 %v253
        %333 = vmatprep.subr.mxu0 %v252
        %334 = vmatpush1.msra.mxu0 %v251
        %335 = vmatprep.subr.mxu0 %v250
        %336 = vmatpush1.msra.mxu0 %v249
        %337 = vmatprep.subr.mxu0 %v248
        %338 = vmatpush1.msra.mxu0 %v247
        %339 = vmatprep.subr.mxu0 %v246
        %340 = vmatpush1.msra.mxu0 %v245
        %341 = vmatprep.subr.mxu0 %v308
        %342 = vmatpush2.msra.mxu0 %v307
        %343 = vmatprep.subr.mxu0 %v306
        %344 = vmatpush2.msra.mxu0 %v305
        %345 = vmatprep.subr.mxu0 %v304
        %346 = vmatpush2.msra.mxu0 %v303
        %347 = vmatprep.subr.mxu0 %v302
        %348 = vmatpush2.msra.mxu0 %v301
        %349 = vmatprep.subr.mxu0 %v300
        %350 = vmatpush2.msra.mxu0 %v299
        %351 = vmatprep.subr.mxu0 %v298
        %352 = vmatpush2.msra.mxu0 %v297
        %353 = vmatprep.subr.mxu0 %v296
        %354 = vmatpush2.msra.mxu0 %v295
        %355 = vmatprep.subr.mxu0 %v294
        %356 = vmatpush2.msra.mxu0 %v293
        %357 = vmatprep.subr.mxu0 %v292
        %358 = vmatpush2.msra.mxu0 %v291
        %359 = vmatprep.subr.mxu0 %v290
        %360 = vmatpush2.msra.mxu0 %v289
        %361 = vmatprep.subr.mxu0 %v288
        %362 = vmatpush2.msra.mxu0 %v287
        %363 = vmatprep.subr.mxu0 %v286
        %364 = vmatpush2.msra.mxu0 %v285
        %365 = vmatprep.subr.mxu0 %v284
        %366 = vmatpush2.msra.mxu0 %v283
        %367 = vmatprep.subr.mxu0 %v282
        %368 = vmatpush2.msra.mxu0 %v281
        %369 = vmatprep.subr.mxu0 %v280
        %370 = vmatpush2.msra.mxu0 %v279
        %371 = vmatprep.subr.mxu0 %v278
        %372 = vmatpush2.msra.mxu0 %v277
        %373 = vmatprep.mubr.f32.mxu0 %v244
        %374 = vmatmul.mubr.f32.gmra.mxu0 %v243
        %v375 = vpop.f32.mrf.mxu0
        %v376 = vadd.f32 0.0, %v375
        %v377 = vpop.f32.mrf.mxu0
        %v378 = vadd.f32 0.0, %v377
        %379 = vdwg.mxu0
        %v380 = vmul.f32 %v376, %v376
        %v381 = vmul.f32 %v378, %v378
        %v382 = vlaneseq
        %v383 = vand.u32 %v382, 127
        %vm384 = vcmp.eq.s32.totalorder %v383, 0
        %v385 = vsel %vm384, 0.0, %v381
        %v386 = vadd.f32 %v380, %v385
        %v387 = vrsqrt.pop %v386
        %v388 = vmul.f32 %v386, %v387
        %vm389 = vcmp.eq.f32.partialorder %v386, inf
        %v390 = vsel %vm389, %v386, %v388
        %vm391 = vcmp.eq.f32.partialorder %v386, 0.0
        %v392 = vand.u32 %v386, 2147483648
        %v393 = vsel %vm391, %v392, %v390
        %v394 = vld [vmem:[#allocation7] sm:$0xff]
        %v395 = vld [vmem:[#allocation7 + $0x8] sm:$0xff]
        %v396 = vld [vmem:[#allocation7 + $0x10] sm:$0xff]
        %v397 = vld [vmem:[#allocation7 + $0x18] sm:$0xff]
        %v398 = vld [vmem:[#allocation7 + $0x20] sm:$0xff]
        %v399 = vld [vmem:[#allocation7 + $0x28] sm:$0xff]
        %v400 = vld [vmem:[#allocation7 + $0x30] sm:$0xff]
        %v401 = vld [vmem:[#allocation7 + $0x38] sm:$0xff]
        %v402 = vld [vmem:[#allocation7 + $0x40] sm:$0xff]
        %v403 = vld [vmem:[#allocation7 + $0x48] sm:$0xff]
        %v404 = vld [vmem:[#allocation7 + $0x50] sm:$0xff]
        %v405 = vld [vmem:[#allocation7 + $0x58] sm:$0xff]
        %v406 = vld [vmem:[#allocation7 + $0x60] sm:$0xff]
        %v407 = vld [vmem:[#allocation7 + $0x68] sm:$0xff]
        %v408 = vld [vmem:[#allocation7 + $0x70] sm:$0xff]
        %v409 = vld [vmem:[#allocation7 + $0x78] sm:$0xff]
        %v410 = vand.u32 2147483647, %v378
        %v411 = vld [vmem:[%s3] sm:$0x1]
        %413 = vset.pattern.permute.xlu0 0
        %414 = vperm.xlu0 %413, %v410
        %v415 = vpop.permute.xlu0 %414
        %v418 = vlaneseq
        %v419 = vshrl.u32 %v418, 7
        %v420 = vsub.s32 0, %v419
        %v421 = vrot.slane %v411, %v420
        %v423 = vmul.f32 %v415, %v421
        %424 = vmatprep.subr.mxu0 0.0
        %425 = vmatpush1.msra.mxu0 %v409
        %426 = vmatprep.subr.mxu0 0.0
        %427 = vmatpush1.msra.mxu0 %v408
        %428 = vmatprep.subr.mxu0 0.0
        %429 = vmatpush1.msra.mxu0 %v407
        %430 = vmatprep.subr.mxu0 0.0
        %431 = vmatpush1.msra.mxu0 %v406
        %432 = vmatprep.subr.mxu0 0.0
        %433 = vmatpush1.msra.mxu0 %v405
        %434 = vmatprep.subr.mxu0 0.0
        %435 = vmatpush1.msra.mxu0 %v404
        %436 = vmatprep.subr.mxu0 0.0
        %437 = vmatpush1.msra.mxu0 %v403
        %438 = vmatprep.subr.mxu0 0.0
        %439 = vmatpush1.msra.mxu0 %v402
        %440 = vmatprep.subr.mxu0 0.0
        %441 = vmatpush1.msra.mxu0 %v401
        %442 = vmatprep.subr.mxu0 0.0
        %443 = vmatpush1.msra.mxu0 %v400
        %444 = vmatprep.subr.mxu0 0.0
        %445 = vmatpush1.msra.mxu0 %v399
        %446 = vmatprep.subr.mxu0 0.0
        %447 = vmatpush1.msra.mxu0 %v398
        %448 = vmatprep.subr.mxu0 0.0
        %449 = vmatpush1.msra.mxu0 %v397
        %450 = vmatprep.subr.mxu0 0.0
        %451 = vmatpush1.msra.mxu0 %v396
        %452 = vmatprep.subr.mxu0 0.0
        %453 = vmatpush1.msra.mxu0 %v395
        %454 = vmatprep.subr.mxu0 0.0
        %455 = vmatpush1.msra.mxu0 %v394
        %456 = vmatprep.subr.mxu0 0.0
        %457 = vmatpush2.msra.mxu0 0.0
        %458 = vmatprep.subr.mxu0 0.0
        %459 = vmatpush2.msra.mxu0 0.0
        %460 = vmatprep.subr.mxu0 0.0
        %461 = vmatpush2.msra.mxu0 0.0
        %462 = vmatprep.subr.mxu0 0.0
        %463 = vmatpush2.msra.mxu0 0.0
        %464 = vmatprep.subr.mxu0 0.0
        %465 = vmatpush2.msra.mxu0 0.0
        %466 = vmatprep.subr.mxu0 0.0
        %467 = vmatpush2.msra.mxu0 0.0
        %468 = vmatprep.subr.mxu0 0.0
        %469 = vmatpush2.msra.mxu0 0.0
        %470 = vmatprep.subr.mxu0 0.0
        %471 = vmatpush2.msra.mxu0 0.0
        %472 = vmatprep.subr.mxu0 0.0
        %473 = vmatpush2.msra.mxu0 0.0
        %474 = vmatprep.subr.mxu0 0.0
        %475 = vmatpush2.msra.mxu0 0.0
        %476 = vmatprep.subr.mxu0 0.0
        %477 = vmatpush2.msra.mxu0 0.0
        %478 = vmatprep.subr.mxu0 0.0
        %479 = vmatpush2.msra.mxu0 0.0
        %480 = vmatprep.subr.mxu0 0.0
        %481 = vmatpush2.msra.mxu0 0.0
        %482 = vmatprep.subr.mxu0 0.0
        %483 = vmatpush2.msra.mxu0 0.0
        %484 = vmatprep.subr.mxu0 0.0
        %485 = vmatpush2.msra.mxu0 0.0
        %486 = vmatprep.subr.mxu0 0.0
        %487 = vmatpush2.msra.mxu0 0.0
        %488 = vmatprep.mubr.f32.mxu0 0.0
        %489 = vmatmul.mubr.f32.gmra.mxu0 %v393
        %v490 = vpop.f32.mrf.mxu0
        %v491 = vadd.f32 %v423, %v490
        %v492 = vpop.f32.mrf.mxu0
        %493 = vdwg.mxu0
        %v494 = vmax.f32 %v491, 1e-05
        %v495 = vlog2.pop %v494
        %v496 = vmul.f32 %v495, 0.6931472
        %v497 = vmul.f32 %v496, 0.4342945
        %498 = vst [vmem:[%s242] sm:$0xff] %v497
        %s499 = sand.u32 %s119, 1
        %s500 = scalar_lea.sflag [#allocation4], %s499
        %s501 = sand.u32 %s119, 1
        %s502 = smul.addr %s501, 8
        %s503 = scalar_lea.vmem [#allocation8], %s502
        // Predicated region
        $region49: #{tpu_custom_call.1} parent=35 // pred_check
          %p504 = pneg %p129
        $region50: #{tpu_custom_call.1} parent=35 // pred_check_branch
          %506 = sbr.rel (%p504) target = $region52
        $region51: #{tpu_custom_call.1} parent=35 // pred_region
          %s508 = ssub.s32 128, 128
          %509 = vsyncadd %s500, %s508
          %s510 = smul.addr %s22, 128
          %s511 = scalar_lea.hbm %s4, %s510
          %s513 = sshll.u32 %s503, 4
          %s514 = int_to_ptr.vmem [resolvable:$true] %s513
          %516 = dma.vmem_to_hbm [thread:$0]  %s514, 128, %s511, %s500
        $region52: #{tpu_custom_call.1} parent=35 // pred_fallthru
          _
      $region36: #{tpu_custom_call.1} parent=5 // pred_fallthru
        _
      %p517 = scmp.le.s32.totalorder 2, %s17
      // Predicated region
      $region53: #{tpu_custom_call.1} parent=5 // pred_check
        %p518 = pneg %p517
      $region54: #{tpu_custom_call.1} parent=5 // pred_check_branch
        %520 = sbr.rel (%p518) target = $region56
      $region55: #{tpu_custom_call.1} parent=5 // pred_region
        %s521 = ssub.s32 %s17, 2
        // Predicated region
        $region57: #{tpu_custom_call.1} parent=55 // pred_check
          %p522 = pneg %p135
        $region58: #{tpu_custom_call.1} parent=55 // pred_check_branch
          %524 = sbr.rel (%p522) target = $region60
        $region59: #{tpu_custom_call.1} parent=55 // pred_region
          %s525 = sand.u32 %s120, 1
          %s526 = scalar_lea.sflag [#allocation4], %s525
          %s527 = sand.u32 %s120, 1
          %s528 = smul.addr %s527, 8
          %s529 = scalar_lea.vmem [#allocation8], %s528
          %530 = dma.done %s526, 128
        $region60: #{tpu_custom_call.1} parent=55 // pred_fallthru
          _
      $region56: #{tpu_custom_call.1} parent=5 // pred_fallthru
        _
    $region6: #{tpu_custom_call.1} parent=1 // loop_footer
      %s21 = sadd.s32 1, %s17
    $region7: #{tpu_custom_call.1} parent=1 // loop_footer_branch
      %16 = sbr.rel target = $region3
    $region8: #{tpu_custom_call.1} parent=1 // loop_exit
      _
    %531 = vsyncpa [#allocation3], 1
    %s532 = scalar_lea.sflag [#allocation3], 1
    %533 = vsyncpa %s532, 1
    %534 = vsyncpa [#allocation6], 1
    %535 = vsyncpa [#allocation4], 1
    %s536 = scalar_lea.sflag [#allocation4], 1
    %537 = vsyncpa %s536, 1

</llo_original>
